<compile_context>
chip_gen: v7x
topology: tpu7x:2x2x1
jax: 0.10.0
libtpu: 0.0.40
codegen_flags: <defaults>
</compile_context>

<pallas_src>
import math

import jax
import jax.numpy as jnp
from jax import lax
from jax.experimental import pallas as pl
from jax.experimental.pallas import tpu as pltpu  # noqa: F401  (tiny model: no grid/pipelining needed)

# ----------------------------- config (small) ------------------------------
B = 2             # batch
L = 8             # max sequence length
BL = B * L        # batch folded into sublanes
BP = 8            # batch rows padded to a full sublane tile for the output slab
H = 32            # hidden size
NH = 2            # attention heads
DH = H // NH      # head dim
F = 64            # FFN intermediate size
V = 50            # vocab size (after resize_token_embeddings)
VP = 64           # vocab padded for the one-hot embedding matmul
C = 3             # num_class
CP = 64           # logits padded -> output slab is exactly 2*H + CP = 128 lanes
NUM_LAYERS = 2
LN_EPS = 1e-12
LANE = 128

# --- w_qkv layout: [NL, H, 3*NH*128]; each Q/K/V head on its own 128-lane block
#     block h        -> Q head h  (lanes 0..DH-1 valid, rest zero)
#     block NH + h   -> K head h
#     block 2NH + h  -> V head h
QKV_LANES = 3 * NH * LANE                  # 768

# --- w_slab (bf16, 64 lanes wide): per-layer [wo_pad | w1 | w2] then [wp | wfc]
WS_WO = 0                                  # [NH*128, H]  (head-padded rows)
WS_W1 = NH * LANE                          # 256, [H, F]
WS_W2 = NH * LANE + H                      # 288, [F, H]
WS_LAYER_ROWS = NH * LANE + H + F          # 352
WS_WP = NUM_LAYERS * WS_LAYER_ROWS         # 704, [H, H]
WS_WFC = WS_WP + H                         # 736, [2H, CP]
WS_ROWS = WS_WFC + 2 * H                   # 800

# --- f32_slab (f32, 128 lanes): per-layer biases/LN, misc biases, embeddings
# per-layer rows (base = layer*16):
#   0..1  : Q bias per head (lanes 0..DH-1)
#   2..3  : K bias per head
#   4..5  : V bias per head
#   6     : attention output bias   (lanes 0..H-1)
#   7, 8  : ln1 gamma, beta
#   9     : FFN intermediate bias   (lanes 0..F-1)
#   10    : FFN output bias
#   11,12 : ln2 gamma, beta
FS_LAYER_ROWS = 16
FS_MISC = NUM_LAYERS * FS_LAYER_ROWS       # 32: +0 emb_ln_g, +1 emb_ln_b, +2 pooler bias, +3 fc bias
FS_EMB = FS_MISC + 8                       # 40: tok_emb rows [VP,H], then tiled pos_emb [BL,H]
FS_ROWS = FS_EMB + VP + BL                 # 120

# --- mask_slab (f32, BL lanes): rows 0..BL-1 attention bias [BL,BL],
#     rows BL..BL+BP-1 CLS selectors, rows BL+BP..BL+2BP-1 scaled syntax masks.


def _ln(x, g, b):
    mu = jnp.mean(x, axis=-1, keepdims=True)
    var = jnp.mean((x - mu) ** 2, axis=-1, keepdims=True)
    return (x - mu) * lax.rsqrt(var + LN_EPS) * g + b


# ----------------------------------------------------------------------------
# One fused Pallas kernel: embedding -> encoder layers -> classifier head.
# ----------------------------------------------------------------------------
def fused_forward_kernel(ids_ref, mask_ref, fslab_ref, wqkv_ref, wslab_ref, out_ref):
    # ---------------- constants built in the wrapper ----------------
    attn_bias = mask_ref[0:BL, :]                                  # [BL, BL] f32
    gmat = mask_ref[BL:BL + 2 * BP, :]                             # [2*BP, BL] f32

    emb_g = fslab_ref[FS_MISC + 0:FS_MISC + 1, 0:H]
    emb_b = fslab_ref[FS_MISC + 1:FS_MISC + 2, 0:H]
    b_pool = fslab_ref[FS_MISC + 2:FS_MISC + 3, 0:H]
    b_fc = fslab_ref[FS_MISC + 3:FS_MISC + 4, 0:CP]

    # ---------------- embedding lookup as a one-hot MXU matmul ----------------
    ids = ids_ref[...]                                             # [BL, 1] int32
    one_hot = (lax.broadcasted_iota(jnp.int32, (BL, VP), 1) == ids).astype(jnp.float32)
    tok = fslab_ref[FS_EMB:FS_EMB + VP, 0:H]                       # [VP, H] f32
    pos = fslab_ref[FS_EMB + VP:FS_EMB + VP + BL, 0:H]             # [BL, H] f32
    x = jnp.dot(one_hot, tok, preferred_element_type=jnp.float32) + pos
    x = _ln(x, emb_g, emb_b)                                       # [BL, H] f32

    scale = 1.0 / math.sqrt(DH)
    for layer in range(NUM_LAYERS):                                # static unroll
        bbase = layer * FS_LAYER_ROWS
        wbase = layer * WS_LAYER_ROWS

        xb = x.astype(jnp.bfloat16)
        # Fused per-head-lane-aligned QKV projection: one [BL,H]@[H,768] matmul.
        qkv = jnp.dot(xb, wqkv_ref[layer], preferred_element_type=jnp.float32)

        ctx_heads = []
        for h in range(NH):                                        # static heads
            # All slices start at multiples of 128 lanes -> free aligned views.
            qh = qkv[:, h * LANE:(h + 1) * LANE] + fslab_ref[bbase + h:bbase + h + 1, :]
            kh = qkv[:, (NH + h) * LANE:(NH + h + 1) * LANE] \
                + fslab_ref[bbase + NH + h:bbase + NH + h + 1, :]
            vh = qkv[:, (2 * NH + h) * LANE:(2 * NH + h + 1) * LANE] \
                + fslab_ref[bbase + 2 * NH + h:bbase + 2 * NH + h + 1, :]
            # Padding lanes (>= DH) of q/k/v are exactly zero, so contracting
            # over 128 lanes equals contracting over DH.
            s = lax.dot_general(qh.astype(jnp.bfloat16), kh.astype(jnp.bfloat16),
                                (((1,), (1,)), ((), ())),
                                preferred_element_type=jnp.float32) * scale + attn_bias
            s = s - jnp.max(s, axis=-1, keepdims=True)
            p = jnp.exp(s)
            p = p / jnp.sum(p, axis=-1, keepdims=True)             # exact divide (f32 VPU)
            ctx_heads.append(jnp.dot(p.astype(jnp.bfloat16), vh.astype(jnp.bfloat16),
                                     preferred_element_type=jnp.float32))   # [BL, 128]
        ctx_all = jnp.concatenate(ctx_heads, axis=-1)              # [BL, NH*128]

        # Single output projection over lane-concatenated heads (rows padded to match).
        wo = wslab_ref[wbase + WS_WO:wbase + WS_WO + NH * LANE, 0:H]         # [256, H] bf16
        attn = jnp.dot(ctx_all.astype(jnp.bfloat16), wo,
                       preferred_element_type=jnp.float32) \
            + fslab_ref[bbase + 6:bbase + 7, 0:H]

        h1 = _ln(x + attn,
                 fslab_ref[bbase + 7:bbase + 8, 0:H],
                 fslab_ref[bbase + 8:bbase + 9, 0:H])

        w1 = wslab_ref[wbase + WS_W1:wbase + WS_W1 + H, 0:F]                # [H, F] bf16
        w2 = wslab_ref[wbase + WS_W2:wbase + WS_W2 + F, 0:H]                # [F, H] bf16
        ff = jnp.dot(h1.astype(jnp.bfloat16), w1,
                     preferred_element_type=jnp.float32) \
            + fslab_ref[bbase + 9:bbase + 10, 0:F]
        # TODO(synk): HuggingFace BERT default is exact erf GELU; tanh approx used.
        ff = jax.nn.gelu(ff, approximate=True)
        ff = jnp.dot(ff.astype(jnp.bfloat16), w2,
                     preferred_element_type=jnp.float32) \
            + fslab_ref[bbase + 10:bbase + 11, 0:H]
        x = _ln(h1 + ff,
                fslab_ref[bbase + 11:bbase + 12, 0:H],
                fslab_ref[bbase + 12:bbase + 13, 0:H])              # [BL, H]

    # -------------------- classifier head ----------------------------------
    # One f32 gather matmul does BOTH the h_[CLS] selection (rows 0..BP-1) and
    # the exact-scaled entity_average (rows BP..2BP-1).
    sel = jnp.dot(gmat, x, preferred_element_type=jnp.float32)      # [2*BP, H]
    cls = sel[0:BP, :]
    avg = sel[BP:2 * BP, :]

    wp = wslab_ref[WS_WP:WS_WP + H, 0:H]                            # [H, H] bf16
    wfc = wslab_ref[WS_WFC:WS_WFC + 2 * H, 0:CP]                    # [2H, CP] bf16

    pooled = jnp.tanh(jnp.dot(cls.astype(jnp.bfloat16), wp,
                              preferred_element_type=jnp.float32) + b_pool)
    concat = jnp.concatenate([pooled, avg], axis=-1)                # [BP, 2H]
    logits = jnp.dot(concat.astype(jnp.bfloat16), wfc,
                     preferred_element_type=jnp.float32) + b_fc     # [BP, CP]
    # Single full-tile unmasked store: [BP, 2H + CP] = [8, 128].
    out_ref[...] = jnp.concatenate([concat, logits], axis=-1)


# ----------------------------------------------------------------------------
# Parameter init (deterministic, synthetic) -> consolidated slabs.
# ----------------------------------------------------------------------------
def init_params(key):
    def dense(k, shape):
        return jax.random.normal(k, shape, jnp.float32) * 0.02

    keys = jax.random.split(key, 4 + NUM_LAYERS)

    fslab = jnp.zeros((FS_ROWS, LANE), jnp.float32)
    wqkv = jnp.zeros((NUM_LAYERS, H, QKV_LANES), jnp.float32)
    wslab = jnp.zeros((WS_ROWS, CP), jnp.float32)

    for layer in range(NUM_LAYERS):
        lk = jax.random.split(keys[4 + layer], 6)
        wq, wk, wv = dense(lk[0], (H, H)), dense(lk[1], (H, H)), dense(lk[2], (H, H))
        wo, w1, w2 = dense(lk[3], (H, H)), dense(lk[4], (H, F)), dense(lk[5], (F, H))

        for h in range(NH):   # per-head, 128-lane-aligned blocks
            wqkv = wqkv.at[layer, :, h * LANE:h * LANE + DH].set(wq[:, h * DH:(h + 1) * DH])
            wqkv = wqkv.at[layer, :, (NH + h) * LANE:(NH + h) * LANE + DH].set(
                wk[:, h * DH:(h + 1) * DH])
            wqkv = wqkv.at[layer, :, (2 * NH + h) * LANE:(2 * NH + h) * LANE + DH].set(
                wv[:, h * DH:(h + 1) * DH])

        wbase = layer * WS_LAYER_ROWS
        for h in range(NH):   # wo rows padded to 128-row blocks matching ctx lanes
            wslab = wslab.at[wbase + WS_WO + h * LANE:wbase + WS_WO + h * LANE + DH, 0:H].set(
                wo[h * DH:(h + 1) * DH, :])
        wslab = wslab.at[wbase + WS_W1:wbase + WS_W1 + H, 0:F].set(w1)
        wslab = wslab.at[wbase + WS_W2:wbase + WS_W2 + F, 0:H].set(w2)

        bbase = layer * FS_LAYER_ROWS
        # All biases are zero in the synthetic init; LayerNorm gammas are one.
        fslab = fslab.at[bbase + 7, 0:H].set(1.0)    # ln1 gamma
        fslab = fslab.at[bbase + 11, 0:H].set(1.0)   # ln2 gamma

    # Pooler / classifier head.
    wp = dense(keys[2], (H, H))
    wfc = dense(keys[3], (2 * H, C))
    wslab = wslab.at[WS_WP:WS_WP + H, 0:H].set(wp)
    wslab = wslab.at[WS_WFC:WS_WFC + 2 * H, 0:C].set(wfc)

    # Embedding LN + embeddings (token table padded to VP, positions tiled over batch).
    fslab = fslab.at[FS_MISC + 0, 0:H].set(1.0)      # emb_ln gamma
    tok = dense(keys[0], (V, H))
    pos = dense(keys[1], (L, H))
    fslab = fslab.at[FS_EMB:FS_EMB + V, 0:H].set(tok)
    fslab = fslab.at[FS_EMB + VP:FS_EMB + VP + BL, 0:H].set(jnp.tile(pos, (B, 1)))

    return {
        "f32_slab": fslab,                           # [120, 128] f32
        "w_qkv": wqkv.astype(jnp.bfloat16),          # [NL, 32, 768] bf16
        "w_slab": wslab.astype(jnp.bfloat16),        # [800, 64]  bf16
    }


def bert_based_classifier(params, input_ids, attention_mask, syntax_mask):
    ids = input_ids.reshape(BL, 1).astype(jnp.int32)

    # Block-diagonal additive attention bias (query attends only to keys of its
    # own sequence AND keys valid under attention_mask).
    pos_idx = jnp.arange(BL)
    seq_of = pos_idx // L
    key_ok = attention_mask.reshape(BL).astype(jnp.float32) > 0.0
    attn_bias = jnp.where((seq_of[:, None] == seq_of[None, :]) & key_ok[None, :],
                          0.0, -1e9).astype(jnp.float32)                    # [BL, BL]

    # CLS-token selector rows (rows >= B are all-zero padding).
    cls_sel = (pos_idx[None, :] == (jnp.arange(BP) * L)[:, None]).astype(jnp.float32)  # [BP, BL]

    # entity_average: exact 1/count folded into the mask in f32.
    smask = syntax_mask.astype(jnp.float32)                                  # [B, L]
    length = jnp.maximum(jnp.sum((smask != 0.0).astype(jnp.float32), axis=1, keepdims=True), 1.0)
    syn_flat = (smask / length).reshape(BL)
    syn_rows = jnp.where(jnp.arange(BP)[:, None] == seq_of[None, :],
                         syn_flat[None, :], 0.0).astype(jnp.float32)         # [BP, BL]

    mask_slab = jnp.concatenate([attn_bias, cls_sel, syn_rows], axis=0)      # [32, 16]

    out = pl.pallas_call(
        fused_forward_kernel,
        out_shape=jax.ShapeDtypeStruct((BP, 2 * H + CP), jnp.float32),       # [8, 128]
    )(ids, mask_slab, params["f32_slab"], params["w_qkv"], params["w_slab"])

    concat_h = out[:B, :2 * H]                   # [B, 2H]
    logits = out[:B, 2 * H:2 * H + C]            # [B, C]
    return logits, concat_h


if __name__ == "__main__":
    key = jax.random.PRNGKey(0)
    k_ids, k_par = jax.random.split(key)
    params = init_params(k_par)

    input_ids = jax.random.randint(k_ids, (B, L), 0, V, dtype=jnp.int32)
    attention_mask = jnp.ones((B, L), jnp.int32)
    syntax_mask = jnp.array([[0, 0, 1, 1, 1, 0, 0, 0],
                             [0, 1, 1, 0, 0, 0, 0, 0]], dtype=jnp.int32)

    fwd = jax.jit(bert_based_classifier)
    logits, concat_h = fwd(params, input_ids, attention_mask, syntax_mask)
    jax.block_until_ready((logits, concat_h))

    assert logits.shape == (B, C) and concat_h.shape == (B, 2 * H)
    assert bool(jnp.all(jnp.isfinite(logits))) and bool(jnp.all(jnp.isfinite(concat_h)))
    print("KERNEL_OK")
</pallas_src>

<mosaic_0001>
module attributes {stable_mosaic.version = 11 : i64} {
  func.func @fused_forward_kernel(%arg0: memref<16x1xi32, #tpu.memory_space<vmem>>, %arg1: memref<32x16xf32, #tpu.memory_space<vmem>>, %arg2: memref<120x128xf32, #tpu.memory_space<vmem>>, %arg3: memref<2x32x768xbf16, #tpu.memory_space<vmem>>, %arg4: memref<800x64xbf16, #tpu.memory_space<vmem>>, %arg5: memref<8x128xf32, #tpu.memory_space<vmem>>) attributes {dimension_semantics = [], scalar_prefetch = 0 : i64, scratch_operands = 0 : i64, tpu.core_type = #tpu.core_type<tc>} {
    %c0 = arith.constant 0 : index
    %c0_0 = arith.constant 0 : index
    %0 = vector.load %arg1[%c0, %c0_0] : memref<32x16xf32, #tpu.memory_space<vmem>>, vector<16x16xf32>
    %c16 = arith.constant 16 : index
    %c0_1 = arith.constant 0 : index
    %1 = vector.load %arg1[%c16, %c0_1] : memref<32x16xf32, #tpu.memory_space<vmem>>, vector<16x16xf32>
    %c32 = arith.constant 32 : index
    %c0_2 = arith.constant 0 : index
    %2 = vector.load %arg2[%c32, %c0_2] : memref<120x128xf32, #tpu.memory_space<vmem>>, vector<1x32xf32>
    %c33 = arith.constant 33 : index
    %c0_3 = arith.constant 0 : index
    %3 = vector.load %arg2[%c33, %c0_3] : memref<120x128xf32, #tpu.memory_space<vmem>>, vector<1x32xf32>
    %c34 = arith.constant 34 : index
    %c0_4 = arith.constant 0 : index
    %4 = vector.load %arg2[%c34, %c0_4] : memref<120x128xf32, #tpu.memory_space<vmem>>, vector<1x32xf32>
    %c35 = arith.constant 35 : index
    %c0_5 = arith.constant 0 : index
    %5 = vector.load %arg2[%c35, %c0_5] : memref<120x128xf32, #tpu.memory_space<vmem>>, vector<1x64xf32>
    %c0_6 = arith.constant 0 : index
    %c0_7 = arith.constant 0 : index
    %6 = vector.load %arg0[%c0_6, %c0_7] : memref<16x1xi32, #tpu.memory_space<vmem>>, vector<16x1xi32>
    %7 = tpu.iota {dimensions = array<i32: 1>} : vector<16x64xi32>
    %8 = vector.broadcast %6 : vector<16x1xi32> to vector<16x64xi32>
    %9 = arith.cmpi eq, %7, %8 : vector<16x64xi32>
    %10 = arith.extui %9 : vector<16x64xi1> to vector<16x64xi32>
    %11 = arith.sitofp %10 : vector<16x64xi32> to vector<16x64xf32>
    %c40 = arith.constant 40 : index
    %c0_8 = arith.constant 0 : index
    %12 = vector.load %arg2[%c40, %c0_8] : memref<120x128xf32, #tpu.memory_space<vmem>>, vector<64x32xf32>
    %c104 = arith.constant 104 : index
    %c0_9 = arith.constant 0 : index
    %13 = vector.load %arg2[%c104, %c0_9] : memref<120x128xf32, #tpu.memory_space<vmem>>, vector<16x32xf32>
    %cst = arith.constant dense<0.000000e+00> : vector<16x32xf32>
    %14 = tpu.matmul %11, %12, %cst {dimension_numbers = #tpu.dot_dimension_numbers<[1], [0], [0], [1], [0, 0, 1, 1], [], []>} : vector<16x64xf32>, vector<64x32xf32>, vector<16x32xf32> -> vector<16x32xf32>
    %15 = arith.addf %14, %13 : vector<16x32xf32>
    %cst_10 = arith.constant dense<0.000000e+00> : vector<16xf32>
    %16 = vector.multi_reduction <add>, %15, %cst_10 [1] : vector<16x32xf32> to vector<16xf32>
    %17 = vector.shape_cast %16 : vector<16xf32> to vector<16x1xf32>
    %cst_11 = arith.constant 3.200000e+01 : f32
    %18 = vector.broadcast %cst_11 : f32 to vector<16x1xf32>
    %19 = arith.divf %17, %18 : vector<16x1xf32>
    %20 = vector.broadcast %19 : vector<16x1xf32> to vector<16x32xf32>
    %21 = arith.subf %15, %20 : vector<16x32xf32>
    %22 = arith.mulf %21, %21 : vector<16x32xf32>
    %cst_12 = arith.constant dense<0.000000e+00> : vector<16xf32>
    %23 = vector.multi_reduction <add>, %22, %cst_12 [1] : vector<16x32xf32> to vector<16xf32>
    %24 = vector.shape_cast %23 : vector<16xf32> to vector<16x1xf32>
    %cst_13 = arith.constant 3.200000e+01 : f32
    %25 = vector.broadcast %cst_13 : f32 to vector<16x1xf32>
    %26 = arith.divf %24, %25 : vector<16x1xf32>
    %27 = vector.broadcast %19 : vector<16x1xf32> to vector<16x32xf32>
    %28 = arith.subf %15, %27 : vector<16x32xf32>
    %cst_14 = arith.constant 9.99999996E-13 : f32
    %29 = vector.broadcast %cst_14 : f32 to vector<16x1xf32>
    %30 = arith.addf %26, %29 : vector<16x1xf32>
    %31 = math.rsqrt %30 : vector<16x1xf32>
    %32 = vector.broadcast %31 : vector<16x1xf32> to vector<16x32xf32>
    %33 = arith.mulf %28, %32 : vector<16x32xf32>
    %34 = vector.broadcast %2 : vector<1x32xf32> to vector<16x32xf32>
    %35 = arith.mulf %33, %34 : vector<16x32xf32>
    %36 = vector.broadcast %3 : vector<1x32xf32> to vector<16x32xf32>
    %37 = arith.addf %35, %36 : vector<16x32xf32>
    %38 = arith.truncf %37 : vector<16x32xf32> to vector<16x32xbf16>
    %c0_15 = arith.constant 0 : index
    %c0_16 = arith.constant 0 : index
    %c0_17 = arith.constant 0 : index
    %39 = vector.load %arg3[%c0_15, %c0_16, %c0_17] : memref<2x32x768xbf16, #tpu.memory_space<vmem>>, vector<1x32x768xbf16>
    %40 = vector.shape_cast %39 : vector<1x32x768xbf16> to vector<32x768xbf16>
    %cst_18 = arith.constant dense<0.000000e+00> : vector<16x768xf32>
    %41 = tpu.matmul %38, %40, %cst_18 {dimension_numbers = #tpu.dot_dimension_numbers<[1], [0], [0], [1], [0, 0, 1, 1], [], []>} : vector<16x32xbf16>, vector<32x768xbf16>, vector<16x768xf32> -> vector<16x768xf32>
    %42 = vector.extract_strided_slice %41 {offsets = [0, 0], sizes = [16, 128], strides = [1, 1]} : vector<16x768xf32> to vector<16x128xf32>
    %c0_19 = arith.constant 0 : index
    %c0_20 = arith.constant 0 : index
    %43 = vector.load %arg2[%c0_19, %c0_20] : memref<120x128xf32, #tpu.memory_space<vmem>>, vector<1x128xf32>
    %44 = vector.broadcast %43 : vector<1x128xf32> to vector<16x128xf32>
    %45 = arith.addf %42, %44 : vector<16x128xf32>
    %46 = vector.extract_strided_slice %41 {offsets = [0, 256], sizes = [16, 128], strides = [1, 1]} : vector<16x768xf32> to vector<16x128xf32>
    %c2 = arith.constant 2 : index
    %c0_21 = arith.constant 0 : index
    %47 = vector.load %arg2[%c2, %c0_21] : memref<120x128xf32, #tpu.memory_space<vmem>>, vector<1x128xf32>
    %48 = vector.broadcast %47 : vector<1x128xf32> to vector<16x128xf32>
    %49 = arith.addf %46, %48 : vector<16x128xf32>
    %50 = vector.extract_strided_slice %41 {offsets = [0, 512], sizes = [16, 128], strides = [1, 1]} : vector<16x768xf32> to vector<16x128xf32>
    %c4 = arith.constant 4 : index
    %c0_22 = arith.constant 0 : index
    %51 = vector.load %arg2[%c4, %c0_22] : memref<120x128xf32, #tpu.memory_space<vmem>>, vector<1x128xf32>
    %52 = vector.broadcast %51 : vector<1x128xf32> to vector<16x128xf32>
    %53 = arith.addf %50, %52 : vector<16x128xf32>
    %54 = arith.truncf %45 : vector<16x128xf32> to vector<16x128xbf16>
    %55 = arith.truncf %49 : vector<16x128xf32> to vector<16x128xbf16>
    %cst_23 = arith.constant dense<0.000000e+00> : vector<16x16xf32>
    %56 = tpu.matmul %54, %55, %cst_23 {dimension_numbers = #tpu.dot_dimension_numbers<[1], [1], [0], [0], [0, 0, 1, 0], [], []>} : vector<16x128xbf16>, vector<16x128xbf16>, vector<16x16xf32> -> vector<16x16xf32>
    %cst_24 = arith.constant 2.500000e-01 : f32
    %57 = vector.broadcast %cst_24 : f32 to vector<16x16xf32>
    %58 = arith.mulf %56, %57 : vector<16x16xf32>
    %59 = arith.addf %58, %0 : vector<16x16xf32>
    %cst_25 = arith.constant dense<0xFF800000> : vector<16xf32>
    %60 = vector.multi_reduction <maximumf>, %59, %cst_25 [1] : vector<16x16xf32> to vector<16xf32>
    %61 = vector.shape_cast %60 : vector<16xf32> to vector<16x1xf32>
    %62 = vector.broadcast %61 : vector<16x1xf32> to vector<16x16xf32>
    %63 = arith.subf %59, %62 : vector<16x16xf32>
    %64 = math.exp %63 : vector<16x16xf32>
    %cst_26 = arith.constant dense<0.000000e+00> : vector<16xf32>
    %65 = vector.multi_reduction <add>, %64, %cst_26 [1] : vector<16x16xf32> to vector<16xf32>
    %66 = vector.shape_cast %65 : vector<16xf32> to vector<16x1xf32>
    %67 = vector.broadcast %66 : vector<16x1xf32> to vector<16x16xf32>
    %68 = arith.divf %64, %67 : vector<16x16xf32>
    %69 = arith.truncf %68 : vector<16x16xf32> to vector<16x16xbf16>
    %70 = arith.truncf %53 : vector<16x128xf32> to vector<16x128xbf16>
    %cst_27 = arith.constant dense<0.000000e+00> : vector<16x128xf32>
    %71 = tpu.matmul %69, %70, %cst_27 {dimension_numbers = #tpu.dot_dimension_numbers<[1], [0], [0], [1], [0, 0, 1, 1], [], []>} : vector<16x16xbf16>, vector<16x128xbf16>, vector<16x128xf32> -> vector<16x128xf32>
    %72 = vector.extract_strided_slice %41 {offsets = [0, 128], sizes = [16, 128], strides = [1, 1]} : vector<16x768xf32> to vector<16x128xf32>
    %c1 = arith.constant 1 : index
    %c0_28 = arith.constant 0 : index
    %73 = vector.load %arg2[%c1, %c0_28] : memref<120x128xf32, #tpu.memory_space<vmem>>, vector<1x128xf32>
    %74 = vector.broadcast %73 : vector<1x128xf32> to vector<16x128xf32>
    %75 = arith.addf %72, %74 : vector<16x128xf32>
    %76 = vector.extract_strided_slice %41 {offsets = [0, 384], sizes = [16, 128], strides = [1, 1]} : vector<16x768xf32> to vector<16x128xf32>
    %c3 = arith.constant 3 : index
    %c0_29 = arith.constant 0 : index
    %77 = vector.load %arg2[%c3, %c0_29] : memref<120x128xf32, #tpu.memory_space<vmem>>, vector<1x128xf32>
    %78 = vector.broadcast %77 : vector<1x128xf32> to vector<16x128xf32>
    %79 = arith.addf %76, %78 : vector<16x128xf32>
    %80 = vector.extract_strided_slice %41 {offsets = [0, 640], sizes = [16, 128], strides = [1, 1]} : vector<16x768xf32> to vector<16x128xf32>
    %c5 = arith.constant 5 : index
    %c0_30 = arith.constant 0 : index
    %81 = vector.load %arg2[%c5, %c0_30] : memref<120x128xf32, #tpu.memory_space<vmem>>, vector<1x128xf32>
    %82 = vector.broadcast %81 : vector<1x128xf32> to vector<16x128xf32>
    %83 = arith.addf %80, %82 : vector<16x128xf32>
    %84 = arith.truncf %75 : vector<16x128xf32> to vector<16x128xbf16>
    %85 = arith.truncf %79 : vector<16x128xf32> to vector<16x128xbf16>
    %cst_31 = arith.constant dense<0.000000e+00> : vector<16x16xf32>
    %86 = tpu.matmul %84, %85, %cst_31 {dimension_numbers = #tpu.dot_dimension_numbers<[1], [1], [0], [0], [0, 0, 1, 0], [], []>} : vector<16x128xbf16>, vector<16x128xbf16>, vector<16x16xf32> -> vector<16x16xf32>
    %cst_32 = arith.constant 2.500000e-01 : f32
    %87 = vector.broadcast %cst_32 : f32 to vector<16x16xf32>
    %88 = arith.mulf %86, %87 : vector<16x16xf32>
    %89 = arith.addf %88, %0 : vector<16x16xf32>
    %cst_33 = arith.constant dense<0xFF800000> : vector<16xf32>
    %90 = vector.multi_reduction <maximumf>, %89, %cst_33 [1] : vector<16x16xf32> to vector<16xf32>
    %91 = vector.shape_cast %90 : vector<16xf32> to vector<16x1xf32>
    %92 = vector.broadcast %91 : vector<16x1xf32> to vector<16x16xf32>
    %93 = arith.subf %89, %92 : vector<16x16xf32>
    %94 = math.exp %93 : vector<16x16xf32>
    %cst_34 = arith.constant dense<0.000000e+00> : vector<16xf32>
    %95 = vector.multi_reduction <add>, %94, %cst_34 [1] : vector<16x16xf32> to vector<16xf32>
    %96 = vector.shape_cast %95 : vector<16xf32> to vector<16x1xf32>
    %97 = vector.broadcast %96 : vector<16x1xf32> to vector<16x16xf32>
    %98 = arith.divf %94, %97 : vector<16x16xf32>
    %99 = arith.truncf %98 : vector<16x16xf32> to vector<16x16xbf16>
    %100 = arith.truncf %83 : vector<16x128xf32> to vector<16x128xbf16>
    %cst_35 = arith.constant dense<0.000000e+00> : vector<16x128xf32>
    %101 = tpu.matmul %99, %100, %cst_35 {dimension_numbers = #tpu.dot_dimension_numbers<[1], [0], [0], [1], [0, 0, 1, 1], [], []>} : vector<16x16xbf16>, vector<16x128xbf16>, vector<16x128xf32> -> vector<16x128xf32>
    %102 = tpu.concatenate %71, %101 in 1 : vector<16x128xf32>, vector<16x128xf32> -> vector<16x256xf32>
    %c0_36 = arith.constant 0 : index
    %c0_37 = arith.constant 0 : index
    %103 = vector.load %arg4[%c0_36, %c0_37] : memref<800x64xbf16, #tpu.memory_space<vmem>>, vector<256x32xbf16>
    %104 = arith.truncf %102 : vector<16x256xf32> to vector<16x256xbf16>
    %cst_38 = arith.constant dense<0.000000e+00> : vector<16x32xf32>
    %105 = tpu.matmul %104, %103, %cst_38 {dimension_numbers = #tpu.dot_dimension_numbers<[1], [0], [0], [1], [0, 0, 1, 1], [], []>} : vector<16x256xbf16>, vector<256x32xbf16>, vector<16x32xf32> -> vector<16x32xf32>
    %c6 = arith.constant 6 : index
    %c0_39 = arith.constant 0 : index
    %106 = vector.load %arg2[%c6, %c0_39] : memref<120x128xf32, #tpu.memory_space<vmem>>, vector<1x32xf32>
    %107 = vector.broadcast %106 : vector<1x32xf32> to vector<16x32xf32>
    %108 = arith.addf %105, %107 : vector<16x32xf32>
    %109 = arith.addf %37, %108 : vector<16x32xf32>
    %c7 = arith.constant 7 : index
    %c0_40 = arith.constant 0 : index
    %110 = vector.load %arg2[%c7, %c0_40] : memref<120x128xf32, #tpu.memory_space<vmem>>, vector<1x32xf32>
    %c8 = arith.constant 8 : index
    %c0_41 = arith.constant 0 : index
    %111 = vector.load %arg2[%c8, %c0_41] : memref<120x128xf32, #tpu.memory_space<vmem>>, vector<1x32xf32>
    %cst_42 = arith.constant dense<0.000000e+00> : vector<16xf32>
    %112 = vector.multi_reduction <add>, %109, %cst_42 [1] : vector<16x32xf32> to vector<16xf32>
    %113 = vector.shape_cast %112 : vector<16xf32> to vector<16x1xf32>
    %cst_43 = arith.constant 3.200000e+01 : f32
    %114 = vector.broadcast %cst_43 : f32 to vector<16x1xf32>
    %115 = arith.divf %113, %114 : vector<16x1xf32>
    %116 = vector.broadcast %115 : vector<16x1xf32> to vector<16x32xf32>
    %117 = arith.subf %109, %116 : vector<16x32xf32>
    %118 = arith.mulf %117, %117 : vector<16x32xf32>
    %cst_44 = arith.constant dense<0.000000e+00> : vector<16xf32>
    %119 = vector.multi_reduction <add>, %118, %cst_44 [1] : vector<16x32xf32> to vector<16xf32>
    %120 = vector.shape_cast %119 : vector<16xf32> to vector<16x1xf32>
    %cst_45 = arith.constant 3.200000e+01 : f32
    %121 = vector.broadcast %cst_45 : f32 to vector<16x1xf32>
    %122 = arith.divf %120, %121 : vector<16x1xf32>
    %123 = vector.broadcast %115 : vector<16x1xf32> to vector<16x32xf32>
    %124 = arith.subf %109, %123 : vector<16x32xf32>
    %cst_46 = arith.constant 9.99999996E-13 : f32
    %125 = vector.broadcast %cst_46 : f32 to vector<16x1xf32>
    %126 = arith.addf %122, %125 : vector<16x1xf32>
    %127 = math.rsqrt %126 : vector<16x1xf32>
    %128 = vector.broadcast %127 : vector<16x1xf32> to vector<16x32xf32>
    %129 = arith.mulf %124, %128 : vector<16x32xf32>
    %130 = vector.broadcast %110 : vector<1x32xf32> to vector<16x32xf32>
    %131 = arith.mulf %129, %130 : vector<16x32xf32>
    %132 = vector.broadcast %111 : vector<1x32xf32> to vector<16x32xf32>
    %133 = arith.addf %131, %132 : vector<16x32xf32>
    %c256 = arith.constant 256 : index
    %c0_47 = arith.constant 0 : index
    %134 = vector.load %arg4[%c256, %c0_47] : memref<800x64xbf16, #tpu.memory_space<vmem>>, vector<32x64xbf16>
    %c288 = arith.constant 288 : index
    %c0_48 = arith.constant 0 : index
    %135 = vector.load %arg4[%c288, %c0_48] : memref<800x64xbf16, #tpu.memory_space<vmem>>, vector<64x32xbf16>
    %136 = arith.truncf %133 : vector<16x32xf32> to vector<16x32xbf16>
    %cst_49 = arith.constant dense<0.000000e+00> : vector<16x64xf32>
    %137 = tpu.matmul %136, %134, %cst_49 {dimension_numbers = #tpu.dot_dimension_numbers<[1], [0], [0], [1], [0, 0, 1, 1], [], []>} : vector<16x32xbf16>, vector<32x64xbf16>, vector<16x64xf32> -> vector<16x64xf32>
    %c9 = arith.constant 9 : index
    %c0_50 = arith.constant 0 : index
    %138 = vector.load %arg2[%c9, %c0_50] : memref<120x128xf32, #tpu.memory_space<vmem>>, vector<1x64xf32>
    %139 = vector.broadcast %138 : vector<1x64xf32> to vector<16x64xf32>
    %140 = arith.addf %137, %139 : vector<16x64xf32>
    %141 = arith.mulf %140, %140 : vector<16x64xf32>
    %142 = arith.mulf %140, %141 : vector<16x64xf32>
    %cst_51 = arith.constant 4.471500e-02 : f32
    %143 = vector.broadcast %cst_51 : f32 to vector<16x64xf32>
    %144 = arith.mulf %143, %142 : vector<16x64xf32>
    %145 = arith.addf %140, %144 : vector<16x64xf32>
    %cst_52 = arith.constant 0.797884583 : f32
    %146 = vector.broadcast %cst_52 : f32 to vector<16x64xf32>
    %147 = arith.mulf %146, %145 : vector<16x64xf32>
    %148 = math.tanh %147 : vector<16x64xf32>
    %cst_53 = arith.constant 1.000000e+00 : f32
    %149 = vector.broadcast %cst_53 : f32 to vector<16x64xf32>
    %150 = arith.addf %149, %148 : vector<16x64xf32>
    %cst_54 = arith.constant 5.000000e-01 : f32
    %151 = vector.broadcast %cst_54 : f32 to vector<16x64xf32>
    %152 = arith.mulf %151, %150 : vector<16x64xf32>
    %153 = arith.mulf %140, %152 : vector<16x64xf32>
    %154 = arith.truncf %153 : vector<16x64xf32> to vector<16x64xbf16>
    %cst_55 = arith.constant dense<0.000000e+00> : vector<16x32xf32>
    %155 = tpu.matmul %154, %135, %cst_55 {dimension_numbers = #tpu.dot_dimension_numbers<[1], [0], [0], [1], [0, 0, 1, 1], [], []>} : vector<16x64xbf16>, vector<64x32xbf16>, vector<16x32xf32> -> vector<16x32xf32>
    %c10 = arith.constant 10 : index
    %c0_56 = arith.constant 0 : index
    %156 = vector.load %arg2[%c10, %c0_56] : memref<120x128xf32, #tpu.memory_space<vmem>>, vector<1x32xf32>
    %157 = vector.broadcast %156 : vector<1x32xf32> to vector<16x32xf32>
    %158 = arith.addf %155, %157 : vector<16x32xf32>
    %159 = arith.addf %133, %158 : vector<16x32xf32>
    %c11 = arith.constant 11 : index
    %c0_57 = arith.constant 0 : index
    %160 = vector.load %arg2[%c11, %c0_57] : memref<120x128xf32, #tpu.memory_space<vmem>>, vector<1x32xf32>
    %c12 = arith.constant 12 : index
    %c0_58 = arith.constant 0 : index
    %161 = vector.load %arg2[%c12, %c0_58] : memref<120x128xf32, #tpu.memory_space<vmem>>, vector<1x32xf32>
    %cst_59 = arith.constant dense<0.000000e+00> : vector<16xf32>
    %162 = vector.multi_reduction <add>, %159, %cst_59 [1] : vector<16x32xf32> to vector<16xf32>
    %163 = vector.shape_cast %162 : vector<16xf32> to vector<16x1xf32>
    %cst_60 = arith.constant 3.200000e+01 : f32
    %164 = vector.broadcast %cst_60 : f32 to vector<16x1xf32>
    %165 = arith.divf %163, %164 : vector<16x1xf32>
    %166 = vector.broadcast %165 : vector<16x1xf32> to vector<16x32xf32>
    %167 = arith.subf %159, %166 : vector<16x32xf32>
    %168 = arith.mulf %167, %167 : vector<16x32xf32>
    %cst_61 = arith.constant dense<0.000000e+00> : vector<16xf32>
    %169 = vector.multi_reduction <add>, %168, %cst_61 [1] : vector<16x32xf32> to vector<16xf32>
    %170 = vector.shape_cast %169 : vector<16xf32> to vector<16x1xf32>
    %cst_62 = arith.constant 3.200000e+01 : f32
    %171 = vector.broadcast %cst_62 : f32 to vector<16x1xf32>
    %172 = arith.divf %170, %171 : vector<16x1xf32>
    %173 = vector.broadcast %165 : vector<16x1xf32> to vector<16x32xf32>
    %174 = arith.subf %159, %173 : vector<16x32xf32>
    %cst_63 = arith.constant 9.99999996E-13 : f32
    %175 = vector.broadcast %cst_63 : f32 to vector<16x1xf32>
    %176 = arith.addf %172, %175 : vector<16x1xf32>
    %177 = math.rsqrt %176 : vector<16x1xf32>
    %178 = vector.broadcast %177 : vector<16x1xf32> to vector<16x32xf32>
    %179 = arith.mulf %174, %178 : vector<16x32xf32>
    %180 = vector.broadcast %160 : vector<1x32xf32> to vector<16x32xf32>
    %181 = arith.mulf %179, %180 : vector<16x32xf32>
    %182 = vector.broadcast %161 : vector<1x32xf32> to vector<16x32xf32>
    %183 = arith.addf %181, %182 : vector<16x32xf32>
    %184 = arith.truncf %183 : vector<16x32xf32> to vector<16x32xbf16>
    %c1_64 = arith.constant 1 : index
    %c0_65 = arith.constant 0 : index
    %c0_66 = arith.constant 0 : index
    %185 = vector.load %arg3[%c1_64, %c0_65, %c0_66] : memref<2x32x768xbf16, #tpu.memory_space<vmem>>, vector<1x32x768xbf16>
    %186 = vector.shape_cast %185 : vector<1x32x768xbf16> to vector<32x768xbf16>
    %cst_67 = arith.constant dense<0.000000e+00> : vector<16x768xf32>
    %187 = tpu.matmul %184, %186, %cst_67 {dimension_numbers = #tpu.dot_dimension_numbers<[1], [0], [0], [1], [0, 0, 1, 1], [], []>} : vector<16x32xbf16>, vector<32x768xbf16>, vector<16x768xf32> -> vector<16x768xf32>
    %188 = vector.extract_strided_slice %187 {offsets = [0, 0], sizes = [16, 128], strides = [1, 1]} : vector<16x768xf32> to vector<16x128xf32>
    %c16_68 = arith.constant 16 : index
    %c0_69 = arith.constant 0 : index
    %189 = vector.load %arg2[%c16_68, %c0_69] : memref<120x128xf32, #tpu.memory_space<vmem>>, vector<1x128xf32>
    %190 = vector.broadcast %189 : vector<1x128xf32> to vector<16x128xf32>
    %191 = arith.addf %188, %190 : vector<16x128xf32>
    %192 = vector.extract_strided_slice %187 {offsets = [0, 256], sizes = [16, 128], strides = [1, 1]} : vector<16x768xf32> to vector<16x128xf32>
    %c18 = arith.constant 18 : index
    %c0_70 = arith.constant 0 : index
    %193 = vector.load %arg2[%c18, %c0_70] : memref<120x128xf32, #tpu.memory_space<vmem>>, vector<1x128xf32>
    %194 = vector.broadcast %193 : vector<1x128xf32> to vector<16x128xf32>
    %195 = arith.addf %192, %194 : vector<16x128xf32>
    %196 = vector.extract_strided_slice %187 {offsets = [0, 512], sizes = [16, 128], strides = [1, 1]} : vector<16x768xf32> to vector<16x128xf32>
    %c20 = arith.constant 20 : index
    %c0_71 = arith.constant 0 : index
    %197 = vector.load %arg2[%c20, %c0_71] : memref<120x128xf32, #tpu.memory_space<vmem>>, vector<1x128xf32>
    %198 = vector.broadcast %197 : vector<1x128xf32> to vector<16x128xf32>
    %199 = arith.addf %196, %198 : vector<16x128xf32>
    %200 = arith.truncf %191 : vector<16x128xf32> to vector<16x128xbf16>
    %201 = arith.truncf %195 : vector<16x128xf32> to vector<16x128xbf16>
    %cst_72 = arith.constant dense<0.000000e+00> : vector<16x16xf32>
    %202 = tpu.matmul %200, %201, %cst_72 {dimension_numbers = #tpu.dot_dimension_numbers<[1], [1], [0], [0], [0, 0, 1, 0], [], []>} : vector<16x128xbf16>, vector<16x128xbf16>, vector<16x16xf32> -> vector<16x16xf32>
    %cst_73 = arith.constant 2.500000e-01 : f32
    %203 = vector.broadcast %cst_73 : f32 to vector<16x16xf32>
    %204 = arith.mulf %202, %203 : vector<16x16xf32>
    %205 = arith.addf %204, %0 : vector<16x16xf32>
    %cst_74 = arith.constant dense<0xFF800000> : vector<16xf32>
    %206 = vector.multi_reduction <maximumf>, %205, %cst_74 [1] : vector<16x16xf32> to vector<16xf32>
    %207 = vector.shape_cast %206 : vector<16xf32> to vector<16x1xf32>
    %208 = vector.broadcast %207 : vector<16x1xf32> to vector<16x16xf32>
    %209 = arith.subf %205, %208 : vector<16x16xf32>
    %210 = math.exp %209 : vector<16x16xf32>
    %cst_75 = arith.constant dense<0.000000e+00> : vector<16xf32>
    %211 = vector.multi_reduction <add>, %210, %cst_75 [1] : vector<16x16xf32> to vector<16xf32>
    %212 = vector.shape_cast %211 : vector<16xf32> to vector<16x1xf32>
    %213 = vector.broadcast %212 : vector<16x1xf32> to vector<16x16xf32>
    %214 = arith.divf %210, %213 : vector<16x16xf32>
    %215 = arith.truncf %214 : vector<16x16xf32> to vector<16x16xbf16>
    %216 = arith.truncf %199 : vector<16x128xf32> to vector<16x128xbf16>
    %cst_76 = arith.constant dense<0.000000e+00> : vector<16x128xf32>
    %217 = tpu.matmul %215, %216, %cst_76 {dimension_numbers = #tpu.dot_dimension_numbers<[1], [0], [0], [1], [0, 0, 1, 1], [], []>} : vector<16x16xbf16>, vector<16x128xbf16>, vector<16x128xf32> -> vector<16x128xf32>
    %218 = vector.extract_strided_slice %187 {offsets = [0, 128], sizes = [16, 128], strides = [1, 1]} : vector<16x768xf32> to vector<16x128xf32>
    %c17 = arith.constant 17 : index
    %c0_77 = arith.constant 0 : index
    %219 = vector.load %arg2[%c17, %c0_77] : memref<120x128xf32, #tpu.memory_space<vmem>>, vector<1x128xf32>
    %220 = vector.broadcast %219 : vector<1x128xf32> to vector<16x128xf32>
    %221 = arith.addf %218, %220 : vector<16x128xf32>
    %222 = vector.extract_strided_slice %187 {offsets = [0, 384], sizes = [16, 128], strides = [1, 1]} : vector<16x768xf32> to vector<16x128xf32>
    %c19 = arith.constant 19 : index
    %c0_78 = arith.constant 0 : index
    %223 = vector.load %arg2[%c19, %c0_78] : memref<120x128xf32, #tpu.memory_space<vmem>>, vector<1x128xf32>
    %224 = vector.broadcast %223 : vector<1x128xf32> to vector<16x128xf32>
    %225 = arith.addf %222, %224 : vector<16x128xf32>
    %226 = vector.extract_strided_slice %187 {offsets = [0, 640], sizes = [16, 128], strides = [1, 1]} : vector<16x768xf32> to vector<16x128xf32>
    %c21 = arith.constant 21 : index
    %c0_79 = arith.constant 0 : index
    %227 = vector.load %arg2[%c21, %c0_79] : memref<120x128xf32, #tpu.memory_space<vmem>>, vector<1x128xf32>
    %228 = vector.broadcast %227 : vector<1x128xf32> to vector<16x128xf32>
    %229 = arith.addf %226, %228 : vector<16x128xf32>
    %230 = arith.truncf %221 : vector<16x128xf32> to vector<16x128xbf16>
    %231 = arith.truncf %225 : vector<16x128xf32> to vector<16x128xbf16>
    %cst_80 = arith.constant dense<0.000000e+00> : vector<16x16xf32>
    %232 = tpu.matmul %230, %231, %cst_80 {dimension_numbers = #tpu.dot_dimension_numbers<[1], [1], [0], [0], [0, 0, 1, 0], [], []>} : vector<16x128xbf16>, vector<16x128xbf16>, vector<16x16xf32> -> vector<16x16xf32>
    %cst_81 = arith.constant 2.500000e-01 : f32
    %233 = vector.broadcast %cst_81 : f32 to vector<16x16xf32>
    %234 = arith.mulf %232, %233 : vector<16x16xf32>
    %235 = arith.addf %234, %0 : vector<16x16xf32>
    %cst_82 = arith.constant dense<0xFF800000> : vector<16xf32>
    %236 = vector.multi_reduction <maximumf>, %235, %cst_82 [1] : vector<16x16xf32> to vector<16xf32>
    %237 = vector.shape_cast %236 : vector<16xf32> to vector<16x1xf32>
    %238 = vector.broadcast %237 : vector<16x1xf32> to vector<16x16xf32>
    %239 = arith.subf %235, %238 : vector<16x16xf32>
    %240 = math.exp %239 : vector<16x16xf32>
    %cst_83 = arith.constant dense<0.000000e+00> : vector<16xf32>
    %241 = vector.multi_reduction <add>, %240, %cst_83 [1] : vector<16x16xf32> to vector<16xf32>
    %242 = vector.shape_cast %241 : vector<16xf32> to vector<16x1xf32>
    %243 = vector.broadcast %242 : vector<16x1xf32> to vector<16x16xf32>
    %244 = arith.divf %240, %243 : vector<16x16xf32>
    %245 = arith.truncf %244 : vector<16x16xf32> to vector<16x16xbf16>
    %246 = arith.truncf %229 : vector<16x128xf32> to vector<16x128xbf16>
    %cst_84 = arith.constant dense<0.000000e+00> : vector<16x128xf32>
    %247 = tpu.matmul %245, %246, %cst_84 {dimension_numbers = #tpu.dot_dimension_numbers<[1], [0], [0], [1], [0, 0, 1, 1], [], []>} : vector<16x16xbf16>, vector<16x128xbf16>, vector<16x128xf32> -> vector<16x128xf32>
    %248 = tpu.concatenate %217, %247 in 1 : vector<16x128xf32>, vector<16x128xf32> -> vector<16x256xf32>
    %c352 = arith.constant 352 : index
    %c0_85 = arith.constant 0 : index
    %249 = vector.load %arg4[%c352, %c0_85] : memref<800x64xbf16, #tpu.memory_space<vmem>>, vector<256x32xbf16>
    %250 = arith.truncf %248 : vector<16x256xf32> to vector<16x256xbf16>
    %cst_86 = arith.constant dense<0.000000e+00> : vector<16x32xf32>
    %251 = tpu.matmul %250, %249, %cst_86 {dimension_numbers = #tpu.dot_dimension_numbers<[1], [0], [0], [1], [0, 0, 1, 1], [], []>} : vector<16x256xbf16>, vector<256x32xbf16>, vector<16x32xf32> -> vector<16x32xf32>
    %c22 = arith.constant 22 : index
    %c0_87 = arith.constant 0 : index
    %252 = vector.load %arg2[%c22, %c0_87] : memref<120x128xf32, #tpu.memory_space<vmem>>, vector<1x32xf32>
    %253 = vector.broadcast %252 : vector<1x32xf32> to vector<16x32xf32>
    %254 = arith.addf %251, %253 : vector<16x32xf32>
    %255 = arith.addf %183, %254 : vector<16x32xf32>
    %c23 = arith.constant 23 : index
    %c0_88 = arith.constant 0 : index
    %256 = vector.load %arg2[%c23, %c0_88] : memref<120x128xf32, #tpu.memory_space<vmem>>, vector<1x32xf32>
    %c24 = arith.constant 24 : index
    %c0_89 = arith.constant 0 : index
    %257 = vector.load %arg2[%c24, %c0_89] : memref<120x128xf32, #tpu.memory_space<vmem>>, vector<1x32xf32>
    %cst_90 = arith.constant dense<0.000000e+00> : vector<16xf32>
    %258 = vector.multi_reduction <add>, %255, %cst_90 [1] : vector<16x32xf32> to vector<16xf32>
    %259 = vector.shape_cast %258 : vector<16xf32> to vector<16x1xf32>
    %cst_91 = arith.constant 3.200000e+01 : f32
    %260 = vector.broadcast %cst_91 : f32 to vector<16x1xf32>
    %261 = arith.divf %259, %260 : vector<16x1xf32>
    %262 = vector.broadcast %261 : vector<16x1xf32> to vector<16x32xf32>
    %263 = arith.subf %255, %262 : vector<16x32xf32>
    %264 = arith.mulf %263, %263 : vector<16x32xf32>
    %cst_92 = arith.constant dense<0.000000e+00> : vector<16xf32>
    %265 = vector.multi_reduction <add>, %264, %cst_92 [1] : vector<16x32xf32> to vector<16xf32>
    %266 = vector.shape_cast %265 : vector<16xf32> to vector<16x1xf32>
    %cst_93 = arith.constant 3.200000e+01 : f32
    %267 = vector.broadcast %cst_93 : f32 to vector<16x1xf32>
    %268 = arith.divf %266, %267 : vector<16x1xf32>
    %269 = vector.broadcast %261 : vector<16x1xf32> to vector<16x32xf32>
    %270 = arith.subf %255, %269 : vector<16x32xf32>
    %cst_94 = arith.constant 9.99999996E-13 : f32
    %271 = vector.broadcast %cst_94 : f32 to vector<16x1xf32>
    %272 = arith.addf %268, %271 : vector<16x1xf32>
    %273 = math.rsqrt %272 : vector<16x1xf32>
    %274 = vector.broadcast %273 : vector<16x1xf32> to vector<16x32xf32>
    %275 = arith.mulf %270, %274 : vector<16x32xf32>
    %276 = vector.broadcast %256 : vector<1x32xf32> to vector<16x32xf32>
    %277 = arith.mulf %275, %276 : vector<16x32xf32>
    %278 = vector.broadcast %257 : vector<1x32xf32> to vector<16x32xf32>
    %279 = arith.addf %277, %278 : vector<16x32xf32>
    %c608 = arith.constant 608 : index
    %c0_95 = arith.constant 0 : index
    %280 = vector.load %arg4[%c608, %c0_95] : memref<800x64xbf16, #tpu.memory_space<vmem>>, vector<32x64xbf16>
    %c640 = arith.constant 640 : index
    %c0_96 = arith.constant 0 : index
    %281 = vector.load %arg4[%c640, %c0_96] : memref<800x64xbf16, #tpu.memory_space<vmem>>, vector<64x32xbf16>
    %282 = arith.truncf %279 : vector<16x32xf32> to vector<16x32xbf16>
    %cst_97 = arith.constant dense<0.000000e+00> : vector<16x64xf32>
    %283 = tpu.matmul %282, %280, %cst_97 {dimension_numbers = #tpu.dot_dimension_numbers<[1], [0], [0], [1], [0, 0, 1, 1], [], []>} : vector<16x32xbf16>, vector<32x64xbf16>, vector<16x64xf32> -> vector<16x64xf32>
    %c25 = arith.constant 25 : index
    %c0_98 = arith.constant 0 : index
    %284 = vector.load %arg2[%c25, %c0_98] : memref<120x128xf32, #tpu.memory_space<vmem>>, vector<1x64xf32>
    %285 = vector.broadcast %284 : vector<1x64xf32> to vector<16x64xf32>
    %286 = arith.addf %283, %285 : vector<16x64xf32>
    %287 = arith.mulf %286, %286 : vector<16x64xf32>
    %288 = arith.mulf %286, %287 : vector<16x64xf32>
    %cst_99 = arith.constant 4.471500e-02 : f32
    %289 = vector.broadcast %cst_99 : f32 to vector<16x64xf32>
    %290 = arith.mulf %289, %288 : vector<16x64xf32>
    %291 = arith.addf %286, %290 : vector<16x64xf32>
    %cst_100 = arith.constant 0.797884583 : f32
    %292 = vector.broadcast %cst_100 : f32 to vector<16x64xf32>
    %293 = arith.mulf %292, %291 : vector<16x64xf32>
    %294 = math.tanh %293 : vector<16x64xf32>
    %cst_101 = arith.constant 1.000000e+00 : f32
    %295 = vector.broadcast %cst_101 : f32 to vector<16x64xf32>
    %296 = arith.addf %295, %294 : vector<16x64xf32>
    %cst_102 = arith.constant 5.000000e-01 : f32
    %297 = vector.broadcast %cst_102 : f32 to vector<16x64xf32>
    %298 = arith.mulf %297, %296 : vector<16x64xf32>
    %299 = arith.mulf %286, %298 : vector<16x64xf32>
    %300 = arith.truncf %299 : vector<16x64xf32> to vector<16x64xbf16>
    %cst_103 = arith.constant dense<0.000000e+00> : vector<16x32xf32>
    %301 = tpu.matmul %300, %281, %cst_103 {dimension_numbers = #tpu.dot_dimension_numbers<[1], [0], [0], [1], [0, 0, 1, 1], [], []>} : vector<16x64xbf16>, vector<64x32xbf16>, vector<16x32xf32> -> vector<16x32xf32>
    %c26 = arith.constant 26 : index
    %c0_104 = arith.constant 0 : index
    %302 = vector.load %arg2[%c26, %c0_104] : memref<120x128xf32, #tpu.memory_space<vmem>>, vector<1x32xf32>
    %303 = vector.broadcast %302 : vector<1x32xf32> to vector<16x32xf32>
    %304 = arith.addf %301, %303 : vector<16x32xf32>
    %305 = arith.addf %279, %304 : vector<16x32xf32>
    %c27 = arith.constant 27 : index
    %c0_105 = arith.constant 0 : index
    %306 = vector.load %arg2[%c27, %c0_105] : memref<120x128xf32, #tpu.memory_space<vmem>>, vector<1x32xf32>
    %c28 = arith.constant 28 : index
    %c0_106 = arith.constant 0 : index
    %307 = vector.load %arg2[%c28, %c0_106] : memref<120x128xf32, #tpu.memory_space<vmem>>, vector<1x32xf32>
    %cst_107 = arith.constant dense<0.000000e+00> : vector<16xf32>
    %308 = vector.multi_reduction <add>, %305, %cst_107 [1] : vector<16x32xf32> to vector<16xf32>
    %309 = vector.shape_cast %308 : vector<16xf32> to vector<16x1xf32>
    %cst_108 = arith.constant 3.200000e+01 : f32
    %310 = vector.broadcast %cst_108 : f32 to vector<16x1xf32>
    %311 = arith.divf %309, %310 : vector<16x1xf32>
    %312 = vector.broadcast %311 : vector<16x1xf32> to vector<16x32xf32>
    %313 = arith.subf %305, %312 : vector<16x32xf32>
    %314 = arith.mulf %313, %313 : vector<16x32xf32>
    %cst_109 = arith.constant dense<0.000000e+00> : vector<16xf32>
    %315 = vector.multi_reduction <add>, %314, %cst_109 [1] : vector<16x32xf32> to vector<16xf32>
    %316 = vector.shape_cast %315 : vector<16xf32> to vector<16x1xf32>
    %cst_110 = arith.constant 3.200000e+01 : f32
    %317 = vector.broadcast %cst_110 : f32 to vector<16x1xf32>
    %318 = arith.divf %316, %317 : vector<16x1xf32>
    %319 = vector.broadcast %311 : vector<16x1xf32> to vector<16x32xf32>
    %320 = arith.subf %305, %319 : vector<16x32xf32>
    %cst_111 = arith.constant 9.99999996E-13 : f32
    %321 = vector.broadcast %cst_111 : f32 to vector<16x1xf32>
    %322 = arith.addf %318, %321 : vector<16x1xf32>
    %323 = math.rsqrt %322 : vector<16x1xf32>
    %324 = vector.broadcast %323 : vector<16x1xf32> to vector<16x32xf32>
    %325 = arith.mulf %320, %324 : vector<16x32xf32>
    %326 = vector.broadcast %306 : vector<1x32xf32> to vector<16x32xf32>
    %327 = arith.mulf %325, %326 : vector<16x32xf32>
    %328 = vector.broadcast %307 : vector<1x32xf32> to vector<16x32xf32>
    %329 = arith.addf %327, %328 : vector<16x32xf32>
    %cst_112 = arith.constant dense<0.000000e+00> : vector<16x32xf32>
    %330 = tpu.matmul %1, %329, %cst_112 {dimension_numbers = #tpu.dot_dimension_numbers<[1], [0], [0], [1], [0, 0, 1, 1], [], []>} : vector<16x16xf32>, vector<16x32xf32>, vector<16x32xf32> -> vector<16x32xf32>
    %331 = vector.extract_strided_slice %330 {offsets = [0, 0], sizes = [8, 32], strides = [1, 1]} : vector<16x32xf32> to vector<8x32xf32>
    %332 = vector.extract_strided_slice %330 {offsets = [8, 0], sizes = [8, 32], strides = [1, 1]} : vector<16x32xf32> to vector<8x32xf32>
    %c704 = arith.constant 704 : index
    %c0_113 = arith.constant 0 : index
    %333 = vector.load %arg4[%c704, %c0_113] : memref<800x64xbf16, #tpu.memory_space<vmem>>, vector<32x32xbf16>
    %c736 = arith.constant 736 : index
    %c0_114 = arith.constant 0 : index
    %334 = vector.load %arg4[%c736, %c0_114] : memref<800x64xbf16, #tpu.memory_space<vmem>>, vector<64x64xbf16>
    %335 = arith.truncf %331 : vector<8x32xf32> to vector<8x32xbf16>
    %cst_115 = arith.constant dense<0.000000e+00> : vector<8x32xf32>
    %336 = tpu.matmul %335, %333, %cst_115 {dimension_numbers = #tpu.dot_dimension_numbers<[1], [0], [0], [1], [0, 0, 1, 1], [], []>} : vector<8x32xbf16>, vector<32x32xbf16>, vector<8x32xf32> -> vector<8x32xf32>
    %337 = vector.broadcast %4 : vector<1x32xf32> to vector<8x32xf32>
    %338 = arith.addf %336, %337 : vector<8x32xf32>
    %339 = math.tanh %338 : vector<8x32xf32>
    %340 = tpu.concatenate %339, %332 in 1 : vector<8x32xf32>, vector<8x32xf32> -> vector<8x64xf32>
    %341 = arith.truncf %340 : vector<8x64xf32> to vector<8x64xbf16>
    %cst_116 = arith.constant dense<0.000000e+00> : vector<8x64xf32>
    %342 = tpu.matmul %341, %334, %cst_116 {dimension_numbers = #tpu.dot_dimension_numbers<[1], [0], [0], [1], [0, 0, 1, 1], [], []>} : vector<8x64xbf16>, vector<64x64xbf16>, vector<8x64xf32> -> vector<8x64xf32>
    %343 = vector.broadcast %5 : vector<1x64xf32> to vector<8x64xf32>
    %344 = arith.addf %342, %343 : vector<8x64xf32>
    %345 = tpu.concatenate %340, %344 in 1 : vector<8x64xf32>, vector<8x64xf32> -> vector<8x128xf32>
    %c0_117 = arith.constant 0 : index
    %c0_118 = arith.constant 0 : index
    %346 = vector.load %arg5[%c0_117, %c0_118] : memref<8x128xf32, #tpu.memory_space<vmem>>, vector<8x128xf32>
    tpu.vector_store %arg5[%c0_117, %c0_118], %345 {strides = array<i32>} : memref<8x128xf32, #tpu.memory_space<vmem>>, vector<8x128xf32>,
    return
  }
}

</mosaic_0001>

<llo_original>
// kernel: bert_based_classifier.1
$region0: #{bert_based_classifier.1}
  #allocation0 [shape = 'u32[]', space=smem, size = 0x4, offset = 0x4, fixed_abs, tag = 'smem constant byte address 0x4 - core index']
  #allocation1 [shape = 'u32[144,128]{1,0:T(1,128)}', space=vmem, size = 0x12000, scoped, tag = 'internal scratch']
  %s0 = inlined_call_operand.vmem [shape: s32[16,1], index: 0, kind: input, shape index: {}]
  %s1 = inlined_call_operand.vmem [shape: f32[32,16], index: 1, kind: input, shape index: {}]
  %s2 = inlined_call_operand.vmem [shape: f32[120,128], index: 2, kind: input, shape index: {}]
  %s3 = inlined_call_operand.vmem [shape: bf16[2,32,768], index: 3, kind: input, shape index: {}]
  %s4 = inlined_call_operand.vmem [shape: bf16[800,64], index: 4, kind: input, shape index: {}]
  %s5 = inlined_call_operand.vmem [shape: f32[8,128], index: 5, kind: output, shape index: {}]
  %s6 = sld [smem:[#allocation0]]
  $region30: #{bert_based_classifier.1} parent=0
    _
  %s8 = ssub.s32 1, %s6
  %s9 = scalar_select 0, %s8, %s6
  // Predicated region
  $region2: #{bert_based_classifier.1} parent=0 // pred_check
    _
  $region3: #{bert_based_classifier.1} parent=0 // pred_check_branch
    %11 = sbr.rel (0) target = $region5
  $region4: #{bert_based_classifier.1} parent=0 // pred_region
    _
  $region5: #{bert_based_classifier.1} parent=0 // pred_fallthru
    _
  // Predicated region
  $region6: #{bert_based_classifier.1} parent=0 // pred_check
    _
  $region7: #{bert_based_classifier.1} parent=0 // pred_check_branch
    %13 = sbr.rel (0) target = $region9
  $region8: #{bert_based_classifier.1} parent=0 // pred_region
    _
  $region9: #{bert_based_classifier.1} parent=0 // pred_fallthru
    _
  // Predicated region
  $region10: #{bert_based_classifier.1} parent=0 // pred_check
    _
  $region11: #{bert_based_classifier.1} parent=0 // pred_check_branch
    %15 = sbr.rel (0) target = $region13
  $region12: #{bert_based_classifier.1} parent=0 // pred_region
    _
  $region13: #{bert_based_classifier.1} parent=0 // pred_fallthru
    _
  // Predicated region
  $region14: #{bert_based_classifier.1} parent=0 // pred_check
    _
  $region15: #{bert_based_classifier.1} parent=0 // pred_check_branch
    %17 = sbr.rel (0) target = $region17
  $region16: #{bert_based_classifier.1} parent=0 // pred_region
    _
  $region17: #{bert_based_classifier.1} parent=0 // pred_fallthru
    _
  // Predicated region
  $region18: #{bert_based_classifier.1} parent=0 // pred_check
    _
  $region19: #{bert_based_classifier.1} parent=0 // pred_check_branch
    %19 = sbr.rel (0) target = $region21
  $region20: #{bert_based_classifier.1} parent=0 // pred_region
    _
  $region21: #{bert_based_classifier.1} parent=0 // pred_fallthru
    _
  %v21 = vld [vmem:[%s1] sm:$0xff]
  %v22 = vld [vmem:[%s1 + $0x8] sm:$0xff]
  %v23 = vld [vmem:[%s1 + $0x10] sm:$0xff]
  %v24 = vld [vmem:[%s1 + $0x18] sm:$0xff]
  %v25 = vld [vmem:[%s2 + $0x20] sm:$0x1]
  %v26 = vld [vmem:[%s2 + $0x21] sm:$0x1]
  %v27 = vld [vmem:[%s2 + $0x22] sm:$0x1]
  %v28 = vld [vmem:[%s2 + $0x23] sm:$0x1]
  %v29 = vld [vmem:[%s0] sm:$0xff]
  %v30 = vld [vmem:[%s0 + $0x8] sm:$0xff]
  %v31 = vlaneseq
  %v32 = vand.u32 %v31, 127
  %33 = vset.pattern.permute.xlu0 0
  %34 = vperm.xlu0 %33, %v29
  %v35 = vpop.permute.xlu0 %34
  %36 = vset.pattern.permute.xlu0 0
  %37 = vperm.xlu0 %36, %v30
  %v38 = vpop.permute.xlu0 %37
  %vm39 = vcmp.eq.s32.totalorder %v32, %v35
  %vm40 = vcmp.eq.s32.totalorder %v32, %v38
  %v41 = vsel %vm39, 1, 0
  %v42 = vsel %vm40, 1, 0
  %v43 = vcvt.s32.f32 %v41
  %v44 = vcvt.s32.f32 %v42
  %v45 = vld [vmem:[%s2 + $0x28] sm:$0xff]
  %v46 = vld [vmem:[%s2 + $0x30] sm:$0xff]
  %v47 = vld [vmem:[%s2 + $0x38] sm:$0xff]
  %v48 = vld [vmem:[%s2 + $0x40] sm:$0xff]
  %v49 = vld [vmem:[%s2 + $0x48] sm:$0xff]
  %v50 = vld [vmem:[%s2 + $0x50] sm:$0xff]
  %v51 = vld [vmem:[%s2 + $0x58] sm:$0xff]
  %v52 = vld [vmem:[%s2 + $0x60] sm:$0xff]
  %v53 = vld [vmem:[%s2 + $0x68] sm:$0xff]
  %v54 = vld [vmem:[%s2 + $0x70] sm:$0xff]
  %vm55 = vcmask 523264
  %v57 = vsel %vm55, %v43, 0
  %v60 = vsel %vm55, %v44, 0
  %62 = vmatprep.subr.mxu0 0.0
  %63 = vmatpush1.msra.mxu0 %v45
  %64 = vmatprep.subr.mxu0 0.0
  %65 = vmatpush1.msra.mxu0 %v46
  %66 = vmatprep.subr.mxu0 0.0
  %67 = vmatpush1.msra.mxu0 %v47
  %68 = vmatprep.subr.mxu0 0.0
  %69 = vmatpush1.msra.mxu0 %v48
  %70 = vmatprep.subr.mxu0 0.0
  %71 = vmatpush1.msra.mxu0 %v49
  %72 = vmatprep.subr.mxu0 0.0
  %73 = vmatpush1.msra.mxu0 %v50
  %74 = vmatprep.subr.mxu0 0.0
  %75 = vmatpush1.msra.mxu0 %v51
  %76 = vmatprep.subr.mxu0 0.0
  %77 = vmatpush1.msra.mxu0 %v52
  %78 = vmatprep.subr.mxu0 0.0
  %79 = vmatpush1.msra.mxu0 0.0
  %80 = vmatprep.subr.mxu0 0.0
  %81 = vmatpush1.msra.mxu0 0.0
  %82 = vmatprep.subr.mxu0 0.0
  %83 = vmatpush1.msra.mxu0 0.0
  %84 = vmatprep.subr.mxu0 0.0
  %85 = vmatpush1.msra.mxu0 0.0
  %86 = vmatprep.subr.mxu0 0.0
  %87 = vmatpush1.msra.mxu0 0.0
  %88 = vmatprep.subr.mxu0 0.0
  %89 = vmatpush1.msra.mxu0 0.0
  %90 = vmatprep.subr.mxu0 0.0
  %91 = vmatpush1.msra.mxu0 0.0
  %92 = vmatprep.subr.mxu0 0.0
  %93 = vmatpush1.msra.mxu0 0.0
  %94 = vmatprep.subr.mxu0 0.0
  %95 = vmatpush1.msra.mxu0 0.0
  %96 = vmatprep.subr.mxu0 0.0
  %97 = vmatpush1.msra.mxu0 0.0
  %98 = vmatprep.subr.mxu0 0.0
  %99 = vmatpush1.msra.mxu0 0.0
  %100 = vmatprep.subr.mxu0 0.0
  %101 = vmatpush1.msra.mxu0 0.0
  %102 = vmatprep.subr.mxu0 0.0
  %103 = vmatpush1.msra.mxu0 0.0
  %104 = vmatprep.subr.mxu0 0.0
  %105 = vmatpush1.msra.mxu0 0.0
  %106 = vmatprep.subr.mxu0 0.0
  %107 = vmatpush1.msra.mxu0 0.0
  %108 = vmatprep.subr.mxu0 0.0
  %109 = vmatpush1.msra.mxu0 0.0
  %110 = vmatprep.subr.mxu0 0.0
  %111 = vmatpush1.msra.mxu0 0.0
  %112 = vmatprep.subr.mxu0 0.0
  %113 = vmatpush1.msra.mxu0 0.0
  %114 = vmatprep.subr.mxu0 0.0
  %115 = vmatpush1.msra.mxu0 0.0
  %116 = vmatprep.subr.mxu0 0.0
  %117 = vmatpush1.msra.mxu0 0.0
  %118 = vmatprep.subr.mxu0 0.0
  %119 = vmatpush1.msra.mxu0 0.0
  %120 = vmatprep.subr.mxu0 0.0
  %121 = vmatpush1.msra.mxu0 0.0
  %122 = vmatprep.subr.mxu0 0.0
  %123 = vmatpush1.msra.mxu0 0.0
  %124 = vmatprep.subr.mxu0 0.0
  %125 = vmatpush1.msra.mxu0 0.0
  %126 = vmatprep.mubr.f32.mxu0 0.0
  %127 = vmatmul.mubr.f32.gmra.mrb[0].mxu0 %v57
  %v128 = vpop.f32.mrb[0].mxu0
  %v129 = vadd.f32 %v53, %v128
  %v130 = vpop.f32.mrb[0].mxu0
  %131 = vmatprep.mubr.f32.mxu0 0.0
  %132 = vmatmul.mubr.f32.gmra.mrb[0].mxu0 %v60
  %v133 = vpop.f32.mrb[0].mxu0
  %v134 = vadd.f32 %v54, %v133
  %v135 = vpop.f32.mrb[0].mxu0
  %136 = vdwg.mxu0
  %vm137 = vcmask 261120
  %v138 = vsel %vm137, %v129, 0.0
  %139 = vadd.xlane.f32.xlu0 %v138
  %v140 = vpop.xlane.xlu0 %139
  %v141 = vsel %vm137, %v134, 0.0
  %142 = vadd.xlane.f32.xlu0 %v141
  %v143 = vpop.xlane.xlu0 %142
  %v144 = vrcp.pop 32.0
  %v145 = vmul.f32 %v140, %v144
  %v146 = vmul.f32 %v143, %v144
  %v147 = vsub.f32 %v129, %v145
  %v148 = vsub.f32 %v134, %v146
  %v149 = vmul.f32 %v147, %v147
  %v150 = vmul.f32 %v148, %v148
  %v151 = vsel %vm137, %v149, 0.0
  %152 = vadd.xlane.f32.xlu0 %v151
  %v153 = vpop.xlane.xlu0 %152
  %v154 = vsel %vm137, %v150, 0.0
  %155 = vadd.xlane.f32.xlu0 %v154
  %v156 = vpop.xlane.xlu0 %155
  %v157 = vmul.f32 %v153, %v144
  %v158 = vmul.f32 %v156, %v144
  %v159 = vadd.f32 %v157, 1e-12
  %v160 = vadd.f32 %v158, 1e-12
  %v161 = vrsqrt.pop %v159
  %v162 = vrsqrt.pop %v160
  %v163 = vmul.f32 %v147, %v161
  %v164 = vmul.f32 %v148, %v162
  %v165 = vlaneseq
  %v166 = vshrl.u32 %v165, 7
  %v167 = vsub.s32 0, %v166
  %v168 = vrot.slane %v25, %v167
  %v169 = vmul.f32 %v163, %v168
  %v170 = vmul.f32 %v164, %v168
  %v171 = vlaneseq
  %v172 = vshrl.u32 %v171, 7
  %v173 = vsub.s32 0, %v172
  %v174 = vrot.slane %v26, %v173
  %v175 = vadd.f32 %v169, %v174
  %v176 = vadd.f32 %v170, %v174
  %v177 = vpack.c.bf16 %v176, %v175
  %v178 = vld [vmem:[%s3] sm:$0xff]
  %v179 = vld [vmem:[%s3 + $0x8] sm:$0xff]
  %v180 = vld [vmem:[%s3 + $0x10] sm:$0xff]
  %v181 = vld [vmem:[%s3 + $0x18] sm:$0xff]
  %v182 = vld [vmem:[%s3 + $0x20] sm:$0xff]
  %v183 = vld [vmem:[%s3 + $0x28] sm:$0xff]
  %v184 = vld [vmem:[%s3 + $0x30] sm:$0xff]
  %v185 = vld [vmem:[%s3 + $0x38] sm:$0xff]
  %v186 = vld [vmem:[%s3 + $0x40] sm:$0xff]
  %v187 = vld [vmem:[%s3 + $0x48] sm:$0xff]
  %v188 = vld [vmem:[%s3 + $0x50] sm:$0xff]
  %v189 = vld [vmem:[%s3 + $0x58] sm:$0xff]
  %v202 = vunpack.c.l.b16 %v178
  %v203 = vunpack.c.h.b16 %v178
  %v204 = vunpack.c.l.b16 %v179
  %v205 = vunpack.c.h.b16 %v179
  %v206 = vunpack.c.l.b16 %v180
  %v207 = vunpack.c.h.b16 %v180
  %v208 = vunpack.c.l.b16 %v181
  %v209 = vunpack.c.h.b16 %v181
  %v210 = vunpack.c.l.b16 %v182
  %v211 = vunpack.c.h.b16 %v182
  %v212 = vunpack.c.l.b16 %v183
  %v213 = vunpack.c.h.b16 %v183
  %v214 = vunpack.c.l.b16 %v184
  %v215 = vunpack.c.h.b16 %v184
  %v216 = vunpack.c.l.b16 %v185
  %v217 = vunpack.c.h.b16 %v185
  %v218 = vunpack.c.l.b16 %v186
  %v219 = vunpack.c.h.b16 %v186
  %v220 = vunpack.c.l.b16 %v187
  %v221 = vunpack.c.h.b16 %v187
  %v222 = vunpack.c.l.b16 %v188
  %v223 = vunpack.c.h.b16 %v188
  %v224 = vunpack.c.l.b16 %v189
  %v225 = vunpack.c.h.b16 %v189
  %v226 = vpack.c.b16 %v208, %v202
  %v227 = vpack.c.b16 %v209, %v203
  %v228 = vpack.c.b16 %v210, %v204
  %v229 = vpack.c.b16 %v211, %v205
  %v230 = vpack.c.b16 %v212, %v206
  %v231 = vpack.c.b16 %v213, %v207
  %v232 = vpack.c.b16 %v220, %v214
  %v233 = vpack.c.b16 %v221, %v215
  %v234 = vpack.c.b16 %v222, %v216
  %v235 = vpack.c.b16 %v223, %v217
  %v236 = vpack.c.b16 %v224, %v218
  %v237 = vpack.c.b16 %v225, %v219
  %v251 = vsel %vm137, %v177, 0
  %253 = vmatprep.subr.bf16.mxu0 %v227
  %254 = vmatpush1.bf16.msra.mxu0 %v226
  %255 = vmatprep.subr.bf16.mxu0 %v233
  %256 = vmatpush1.bf16.msra.mxu0 %v232
  %257 = vmatprep.subr.bf16.mxu0 0
  %258 = vmatpush1.bf16.msra.mxu0 0
  %259 = vmatprep.subr.bf16.mxu0 0
  %260 = vmatpush1.bf16.msra.mxu0 0
  %261 = vmatprep.subr.bf16.mxu0 0
  %262 = vmatpush1.bf16.msra.mxu0 0
  %263 = vmatprep.subr.bf16.mxu0 0
  %264 = vmatpush1.bf16.msra.mxu0 0
  %265 = vmatprep.subr.bf16.mxu0 0
  %266 = vmatpush1.bf16.msra.mxu0 0
  %267 = vmatprep.subr.bf16.mxu0 0
  %268 = vmatpush1.bf16.msra.mxu0 0
  %269 = vmatprep.subr.bf16.mxu0 0
  %270 = vmatpush1.bf16.msra.mxu0 0
  %271 = vmatprep.subr.bf16.mxu0 0
  %272 = vmatpush1.bf16.msra.mxu0 0
  %273 = vmatprep.subr.bf16.mxu0 0
  %274 = vmatpush1.bf16.msra.mxu0 0
  %275 = vmatprep.subr.bf16.mxu0 0
  %276 = vmatpush1.bf16.msra.mxu0 0
  %277 = vmatprep.subr.bf16.mxu0 0
  %278 = vmatpush1.bf16.msra.mxu0 0
  %279 = vmatprep.subr.bf16.mxu0 0
  %280 = vmatpush1.bf16.msra.mxu0 0
  %281 = vmatprep.subr.bf16.mxu0 0
  %282 = vmatpush1.bf16.msra.mxu0 0
  %283 = vmatprep.subr.bf16.mxu0 0
  %284 = vmatpush1.bf16.msra.mxu0 0
  %285 = vmatprep.mubr.bf16.mxu0 0
  %286 = vmatmul.mubr.bf16.gmra.mrb[0].mxu0 %v251
  %v287 = vpop.f32.mrb[0].mxu0
  %v288 = vadd.f32 0.0, %v287
  %v289 = vpop.f32.mrb[0].mxu0
  %v290 = vadd.f32 0.0, %v289
  %v291 = vpop.f32.mrb[0].mxu0
  %v292 = vadd.f32 0.0, %v291
  %v293 = vpop.f32.mrb[0].mxu0
  %v294 = vadd.f32 0.0, %v293
  %295 = vdwg.mxu0
  %296 = vmatprep.subr.bf16.mxu0 %v229
  %297 = vmatpush1.bf16.msra.mxu0 %v228
  %298 = vmatprep.subr.bf16.mxu0 %v235
  %299 = vmatpush1.bf16.msra.mxu0 %v234
  %300 = vmatprep.subr.bf16.mxu0 0
  %301 = vmatpush1.bf16.msra.mxu0 0
  %302 = vmatprep.subr.bf16.mxu0 0
  %303 = vmatpush1.bf16.msra.mxu0 0
  %304 = vmatprep.subr.bf16.mxu0 0
  %305 = vmatpush1.bf16.msra.mxu0 0
  %306 = vmatprep.subr.bf16.mxu0 0
  %307 = vmatpush1.bf16.msra.mxu0 0
  %308 = vmatprep.subr.bf16.mxu0 0
  %309 = vmatpush1.bf16.msra.mxu0 0
  %310 = vmatprep.subr.bf16.mxu0 0
  %311 = vmatpush1.bf16.msra.mxu0 0
  %312 = vmatprep.subr.bf16.mxu0 0
  %313 = vmatpush1.bf16.msra.mxu0 0
  %314 = vmatprep.subr.bf16.mxu0 0
  %315 = vmatpush1.bf16.msra.mxu0 0
  %316 = vmatprep.subr.bf16.mxu0 0
  %317 = vmatpush1.bf16.msra.mxu0 0
  %318 = vmatprep.subr.bf16.mxu0 0
  %319 = vmatpush1.bf16.msra.mxu0 0
  %320 = vmatprep.subr.bf16.mxu0 0
  %321 = vmatpush1.bf16.msra.mxu0 0
  %322 = vmatprep.subr.bf16.mxu0 0
  %323 = vmatpush1.bf16.msra.mxu0 0
  %324 = vmatprep.subr.bf16.mxu0 0
  %325 = vmatpush1.bf16.msra.mxu0 0
  %326 = vmatprep.subr.bf16.mxu0 0
  %327 = vmatpush1.bf16.msra.mxu0 0
  %328 = vmatprep.mubr.bf16.mxu0 0
  %329 = vmatmul.mubr.bf16.gmra.mrb[0].mxu0 %v251
  %v330 = vpop.f32.mrb[0].mxu0
  %v331 = vadd.f32 0.0, %v330
  %v332 = vpop.f32.mrb[0].mxu0
  %v333 = vadd.f32 0.0, %v332
  %v334 = vpop.f32.mrb[0].mxu0
  %v335 = vadd.f32 0.0, %v334
  %v336 = vpop.f32.mrb[0].mxu0
  %v337 = vadd.f32 0.0, %v336
  %338 = vdwg.mxu0
  %339 = vmatprep.subr.bf16.mxu0 %v231
  %340 = vmatpush1.bf16.msra.mxu0 %v230
  %341 = vmatprep.subr.bf16.mxu0 %v237
  %342 = vmatpush1.bf16.msra.mxu0 %v236
  %343 = vmatprep.subr.bf16.mxu0 0
  %344 = vmatpush1.bf16.msra.mxu0 0
  %345 = vmatprep.subr.bf16.mxu0 0
  %346 = vmatpush1.bf16.msra.mxu0 0
  %347 = vmatprep.subr.bf16.mxu0 0
  %348 = vmatpush1.bf16.msra.mxu0 0
  %349 = vmatprep.subr.bf16.mxu0 0
  %350 = vmatpush1.bf16.msra.mxu0 0
  %351 = vmatprep.subr.bf16.mxu0 0
  %352 = vmatpush1.bf16.msra.mxu0 0
  %353 = vmatprep.subr.bf16.mxu0 0
  %354 = vmatpush1.bf16.msra.mxu0 0
  %355 = vmatprep.subr.bf16.mxu0 0
  %356 = vmatpush1.bf16.msra.mxu0 0
  %357 = vmatprep.subr.bf16.mxu0 0
  %358 = vmatpush1.bf16.msra.mxu0 0
  %359 = vmatprep.subr.bf16.mxu0 0
  %360 = vmatpush1.bf16.msra.mxu0 0
  %361 = vmatprep.subr.bf16.mxu0 0
  %362 = vmatpush1.bf16.msra.mxu0 0
  %363 = vmatprep.subr.bf16.mxu0 0
  %364 = vmatpush1.bf16.msra.mxu0 0
  %365 = vmatprep.subr.bf16.mxu0 0
  %366 = vmatpush1.bf16.msra.mxu0 0
  %367 = vmatprep.subr.bf16.mxu0 0
  %368 = vmatpush1.bf16.msra.mxu0 0
  %369 = vmatprep.subr.bf16.mxu0 0
  %370 = vmatpush1.bf16.msra.mxu0 0
  %371 = vmatprep.mubr.bf16.mxu0 0
  %372 = vmatmul.mubr.bf16.gmra.mrb[0].mxu0 %v251
  %v373 = vpop.f32.mrb[0].mxu0
  %v374 = vadd.f32 0.0, %v373
  %v375 = vpop.f32.mrb[0].mxu0
  %v376 = vadd.f32 0.0, %v375
  %v377 = vpop.f32.mrb[0].mxu0
  %v378 = vadd.f32 0.0, %v377
  %v379 = vpop.f32.mrb[0].mxu0
  %v380 = vadd.f32 0.0, %v379
  %381 = vdwg.mxu0
  %v382 = vld [vmem:[%s2] sm:$0x1]
  %v383 = vlaneseq
  %v384 = vshrl.u32 %v383, 7
  %v385 = vsub.s32 0, %v384
  %v386 = vrot.slane %v382, %v385
  %v387 = vadd.f32 %v288, %v386
  %v388 = vadd.f32 %v292, %v386
  %v389 = vld [vmem:[%s2 + $0x2] sm:$0x1]
  %v390 = vlaneseq
  %v391 = vshrl.u32 %v390, 7
  %v392 = vsub.s32 0, %v391
  %v393 = vrot.slane %v389, %v392
  %v394 = vadd.f32 %v331, %v393
  %v395 = vadd.f32 %v335, %v393
  %v396 = vld [vmem:[%s2 + $0x4] sm:$0x1]
  %v397 = vlaneseq
  %v398 = vshrl.u32 %v397, 7
  %v399 = vsub.s32 0, %v398
  %v400 = vrot.slane %v396, %v399
  %v401 = vadd.f32 %v374, %v400
  %v402 = vadd.f32 %v378, %v400
  %v403 = vpack.c.bf16 %v388, %v387
  %v404 = vpack.c.bf16 %v395, %v394
  %405 = vmatprep.subr.bf16.mxu0 0
  %406 = vmatpush1.bf16.xpose.msra.mxu0 %v404
  %407 = vmatprep.subr.bf16.mxu0 0
  %408 = vmatpush1.bf16.xpose.msra.mxu0 0
  %409 = vmatprep.subr.bf16.mxu0 0
  %410 = vmatpush1.bf16.xpose.msra.mxu0 0
  %411 = vmatprep.subr.bf16.mxu0 0
  %412 = vmatpush1.bf16.xpose.msra.mxu0 0
  %413 = vmatprep.subr.bf16.mxu0 0
  %414 = vmatpush1.bf16.xpose.msra.mxu0 0
  %415 = vmatprep.subr.bf16.mxu0 0
  %416 = vmatpush1.bf16.xpose.msra.mxu0 0
  %417 = vmatprep.subr.bf16.mxu0 0
  %418 = vmatpush1.bf16.xpose.msra.mxu0 0
  %419 = vmatprep.subr.bf16.mxu0 0
  %420 = vmatpush1.bf16.xpose.msra.mxu0 0
  %421 = vmatprep.subr.bf16.mxu0 0
  %422 = vmatpush1.bf16.xpose.msra.mxu0 0
  %423 = vmatprep.subr.bf16.mxu0 0
  %424 = vmatpush1.bf16.xpose.msra.mxu0 0
  %425 = vmatprep.subr.bf16.mxu0 0
  %426 = vmatpush1.bf16.xpose.msra.mxu0 0
  %427 = vmatprep.subr.bf16.mxu0 0
  %428 = vmatpush1.bf16.xpose.msra.mxu0 0
  %429 = vmatprep.subr.bf16.mxu0 0
  %430 = vmatpush1.bf16.xpose.msra.mxu0 0
  %431 = vmatprep.subr.bf16.mxu0 0
  %432 = vmatpush1.bf16.xpose.msra.mxu0 0
  %433 = vmatprep.subr.bf16.mxu0 0
  %434 = vmatpush1.bf16.xpose.msra.mxu0 0
  %435 = vmatprep.subr.bf16.mxu0 0
  %436 = vmatpush1.bf16.xpose.msra.mxu0 0
  %437 = vmatprep.mubr.bf16.mxu0 0
  %438 = vmatmul.mubr.bf16.gmra.mrb[0].mxu0 %v403
  %v439 = vpop.f32.mrb[0].mxu0
  %v440 = vadd.f32 0.0, %v439
  %v441 = vpop.f32.mrb[0].mxu0
  %v442 = vpop.f32.mrb[0].mxu0
  %v443 = vadd.f32 0.0, %v442
  %v444 = vpop.f32.mrb[0].mxu0
  %445 = vdwg.mxu0
  %v446 = vmul.f32 %v440, 0.25
  %v447 = vmul.f32 %v443, 0.25
  %v448 = vadd.f32 %v446, %v21
  %v449 = vadd.f32 %v447, %v22
  %vm450 = vcmask 130048
  %v451 = vsel %vm450, %v448, -inf
  %452 = vmax.xlane.f32.xlu0 %v451
  %v453 = vpop.xlane.xlu0 %452
  %v454 = vsel %vm450, %v449, -inf
  %455 = vmax.xlane.f32.xlu0 %v454
  %v456 = vpop.xlane.xlu0 %455
  %v457 = vsub.f32 %v448, %v453
  %v458 = vsub.f32 %v449, %v456
  %v459 = vmul.f32 %v457, 1.442695
  %v460 = vpow.pop %v459
  %v461 = vmul.f32 %v458, 1.442695
  %v462 = vpow.pop %v461
  %v463 = vsel %vm450, %v460, 0.0
  %464 = vadd.xlane.f32.xlu0 %v463
  %v465 = vpop.xlane.xlu0 %464
  %v466 = vsel %vm450, %v462, 0.0
  %467 = vadd.xlane.f32.xlu0 %v466
  %v468 = vpop.xlane.xlu0 %467
  %v469 = vrcp.pop %v465
  %v470 = vmul.f32 %v460, %v469
  %v471 = vrcp.pop %v468
  %v472 = vmul.f32 %v462, %v471
  %v473 = vpack.c.bf16 %v472, %v470
  %v474 = vpack.c.bf16 %v402, %v401
  %v476 = vsel %vm450, %v473, 0
  %478 = vmatprep.subr.bf16.mxu0 0
  %479 = vmatpush1.bf16.msra.mxu0 %v474
  %480 = vmatprep.subr.bf16.mxu0 0
  %481 = vmatpush1.bf16.msra.mxu0 0
  %482 = vmatprep.subr.bf16.mxu0 0
  %483 = vmatpush1.bf16.msra.mxu0 0
  %484 = vmatprep.subr.bf16.mxu0 0
  %485 = vmatpush1.bf16.msra.mxu0 0
  %486 = vmatprep.subr.bf16.mxu0 0
  %487 = vmatpush1.bf16.msra.mxu0 0
  %488 = vmatprep.subr.bf16.mxu0 0
  %489 = vmatpush1.bf16.msra.mxu0 0
  %490 = vmatprep.subr.bf16.mxu0 0
  %491 = vmatpush1.bf16.msra.mxu0 0
  %492 = vmatprep.subr.bf16.mxu0 0
  %493 = vmatpush1.bf16.msra.mxu0 0
  %494 = vmatprep.subr.bf16.mxu0 0
  %495 = vmatpush1.bf16.msra.mxu0 0
  %496 = vmatprep.subr.bf16.mxu0 0
  %497 = vmatpush1.bf16.msra.mxu0 0
  %498 = vmatprep.subr.bf16.mxu0 0
  %499 = vmatpush1.bf16.msra.mxu0 0
  %500 = vmatprep.subr.bf16.mxu0 0
  %501 = vmatpush1.bf16.msra.mxu0 0
  %502 = vmatprep.subr.bf16.mxu0 0
  %503 = vmatpush1.bf16.msra.mxu0 0
  %504 = vmatprep.subr.bf16.mxu0 0
  %505 = vmatpush1.bf16.msra.mxu0 0
  %506 = vmatprep.subr.bf16.mxu0 0
  %507 = vmatpush1.bf16.msra.mxu0 0
  %508 = vmatprep.subr.bf16.mxu0 0
  %509 = vmatpush1.bf16.msra.mxu0 0
  %510 = vmatprep.mubr.bf16.mxu0 0
  %511 = vmatmul.mubr.bf16.gmra.mrb[0].mxu0 %v476
  %v512 = vpop.f32.mrb[0].mxu0
  %v513 = vadd.f32 0.0, %v512
  %v514 = vpop.f32.mrb[0].mxu0
  %v515 = vpop.f32.mrb[0].mxu0
  %v516 = vadd.f32 0.0, %v515
  %v517 = vpop.f32.mrb[0].mxu0
  %518 = vdwg.mxu0
  %v519 = vld [vmem:[%s2 + $0x1] sm:$0x1]
  %v520 = vlaneseq
  %v521 = vshrl.u32 %v520, 7
  %v522 = vsub.s32 0, %v521
  %v523 = vrot.slane %v519, %v522
  %v524 = vadd.f32 %v290, %v523
  %v525 = vadd.f32 %v294, %v523
  %v526 = vld [vmem:[%s2 + $0x3] sm:$0x1]
  %v527 = vlaneseq
  %v528 = vshrl.u32 %v527, 7
  %v529 = vsub.s32 0, %v528
  %v530 = vrot.slane %v526, %v529
  %v531 = vadd.f32 %v333, %v530
  %v532 = vadd.f32 %v337, %v530
  %v533 = vld [vmem:[%s2 + $0x5] sm:$0x1]
  %v534 = vlaneseq
  %v535 = vshrl.u32 %v534, 7
  %v536 = vsub.s32 0, %v535
  %v537 = vrot.slane %v533, %v536
  %v538 = vadd.f32 %v376, %v537
  %v539 = vadd.f32 %v380, %v537
  %v540 = vpack.c.bf16 %v525, %v524
  %v541 = vpack.c.bf16 %v532, %v531
  %542 = vmatprep.subr.bf16.mxu0 0
  %543 = vmatpush1.bf16.xpose.msra.mxu0 %v541
  %544 = vmatprep.subr.bf16.mxu0 0
  %545 = vmatpush1.bf16.xpose.msra.mxu0 0
  %546 = vmatprep.subr.bf16.mxu0 0
  %547 = vmatpush1.bf16.xpose.msra.mxu0 0
  %548 = vmatprep.subr.bf16.mxu0 0
  %549 = vmatpush1.bf16.xpose.msra.mxu0 0
  %550 = vmatprep.subr.bf16.mxu0 0
  %551 = vmatpush1.bf16.xpose.msra.mxu0 0
  %552 = vmatprep.subr.bf16.mxu0 0
  %553 = vmatpush1.bf16.xpose.msra.mxu0 0
  %554 = vmatprep.subr.bf16.mxu0 0
  %555 = vmatpush1.bf16.xpose.msra.mxu0 0
  %556 = vmatprep.subr.bf16.mxu0 0
  %557 = vmatpush1.bf16.xpose.msra.mxu0 0
  %558 = vmatprep.subr.bf16.mxu0 0
  %559 = vmatpush1.bf16.xpose.msra.mxu0 0
  %560 = vmatprep.subr.bf16.mxu0 0
  %561 = vmatpush1.bf16.xpose.msra.mxu0 0
  %562 = vmatprep.subr.bf16.mxu0 0
  %563 = vmatpush1.bf16.xpose.msra.mxu0 0
  %564 = vmatprep.subr.bf16.mxu0 0
  %565 = vmatpush1.bf16.xpose.msra.mxu0 0
  %566 = vmatprep.subr.bf16.mxu0 0
  %567 = vmatpush1.bf16.xpose.msra.mxu0 0
  %568 = vmatprep.subr.bf16.mxu0 0
  %569 = vmatpush1.bf16.xpose.msra.mxu0 0
  %570 = vmatprep.subr.bf16.mxu0 0
  %571 = vmatpush1.bf16.xpose.msra.mxu0 0
  %572 = vmatprep.subr.bf16.mxu0 0
  %573 = vmatpush1.bf16.xpose.msra.mxu0 0
  %574 = vmatprep.mubr.bf16.mxu0 0
  %575 = vmatmul.mubr.bf16.gmra.mrb[0].mxu0 %v540
  %v576 = vpop.f32.mrb[0].mxu0
  %v577 = vadd.f32 0.0, %v576
  %v578 = vpop.f32.mrb[0].mxu0
  %v579 = vpop.f32.mrb[0].mxu0
  %v580 = vadd.f32 0.0, %v579
  %v581 = vpop.f32.mrb[0].mxu0
  %582 = vdwg.mxu0
  %v583 = vmul.f32 %v577, 0.25
  %v584 = vmul.f32 %v580, 0.25
  %v585 = vadd.f32 %v583, %v21
  %v586 = vadd.f32 %v584, %v22
  %v587 = vsel %vm450, %v585, -inf
  %588 = vmax.xlane.f32.xlu0 %v587
  %v589 = vpop.xlane.xlu0 %588
  %v590 = vsel %vm450, %v586, -inf
  %591 = vmax.xlane.f32.xlu0 %v590
  %v592 = vpop.xlane.xlu0 %591
  %v593 = vsub.f32 %v585, %v589
  %v594 = vsub.f32 %v586, %v592
  %v595 = vmul.f32 %v593, 1.442695
  %v596 = vpow.pop %v595
  %v597 = vmul.f32 %v594, 1.442695
  %v598 = vpow.pop %v597
  %v599 = vsel %vm450, %v596, 0.0
  %600 = vadd.xlane.f32.xlu0 %v599
  %v601 = vpop.xlane.xlu0 %600
  %v602 = vsel %vm450, %v598, 0.0
  %603 = vadd.xlane.f32.xlu0 %v602
  %v604 = vpop.xlane.xlu0 %603
  %v605 = vrcp.pop %v601
  %v606 = vmul.f32 %v596, %v605
  %v607 = vrcp.pop %v604
  %v608 = vmul.f32 %v598, %v607
  %v609 = vpack.c.bf16 %v608, %v606
  %v610 = vpack.c.bf16 %v539, %v538
  %v612 = vsel %vm450, %v609, 0
  %614 = vmatprep.subr.bf16.mxu0 0
  %615 = vmatpush1.bf16.msra.mxu0 %v610
  %616 = vmatprep.subr.bf16.mxu0 0
  %617 = vmatpush1.bf16.msra.mxu0 0
  %618 = vmatprep.subr.bf16.mxu0 0
  %619 = vmatpush1.bf16.msra.mxu0 0
  %620 = vmatprep.subr.bf16.mxu0 0
  %621 = vmatpush1.bf16.msra.mxu0 0
  %622 = vmatprep.subr.bf16.mxu0 0
  %623 = vmatpush1.bf16.msra.mxu0 0
  %624 = vmatprep.subr.bf16.mxu0 0
  %625 = vmatpush1.bf16.msra.mxu0 0
  %626 = vmatprep.subr.bf16.mxu0 0
  %627 = vmatpush1.bf16.msra.mxu0 0
  %628 = vmatprep.subr.bf16.mxu0 0
  %629 = vmatpush1.bf16.msra.mxu0 0
  %630 = vmatprep.subr.bf16.mxu0 0
  %631 = vmatpush1.bf16.msra.mxu0 0
  %632 = vmatprep.subr.bf16.mxu0 0
  %633 = vmatpush1.bf16.msra.mxu0 0
  %634 = vmatprep.subr.bf16.mxu0 0
  %635 = vmatpush1.bf16.msra.mxu0 0
  %636 = vmatprep.subr.bf16.mxu0 0
  %637 = vmatpush1.bf16.msra.mxu0 0
  %638 = vmatprep.subr.bf16.mxu0 0
  %639 = vmatpush1.bf16.msra.mxu0 0
  %640 = vmatprep.subr.bf16.mxu0 0
  %641 = vmatpush1.bf16.msra.mxu0 0
  %642 = vmatprep.subr.bf16.mxu0 0
  %643 = vmatpush1.bf16.msra.mxu0 0
  %644 = vmatprep.subr.bf16.mxu0 0
  %645 = vmatpush1.bf16.msra.mxu0 0
  %646 = vmatprep.mubr.bf16.mxu0 0
  %647 = vmatmul.mubr.bf16.gmra.mrb[0].mxu0 %v612
  %v648 = vpop.f32.mrb[0].mxu0
  %v649 = vadd.f32 0.0, %v648
  %v650 = vpop.f32.mrb[0].mxu0
  %v651 = vpop.f32.mrb[0].mxu0
  %v652 = vadd.f32 0.0, %v651
  %v653 = vpop.f32.mrb[0].mxu0
  %654 = vdwg.mxu0
  %v655 = vld [vmem:[%s4] sm:$0xf]
  %v656 = vld [vmem:[%s4 + $0x4] sm:$0xf]
  %v657 = vld [vmem:[%s4 + $0x8] sm:$0xf]
  %v658 = vld [vmem:[%s4 + $0xc] sm:$0xf]
  %v659 = vld [vmem:[%s4 + $0x10] sm:$0xf]
  %v660 = vld [vmem:[%s4 + $0x14] sm:$0xf]
  %v661 = vld [vmem:[%s4 + $0x18] sm:$0xf]
  %v662 = vld [vmem:[%s4 + $0x1c] sm:$0xf]
  %v663 = vld [vmem:[%s4 + $0x20] sm:$0xf]
  %v664 = vld [vmem:[%s4 + $0x24] sm:$0xf]
  %v665 = vld [vmem:[%s4 + $0x28] sm:$0xf]
  %v666 = vld [vmem:[%s4 + $0x2c] sm:$0xf]
  %v667 = vld [vmem:[%s4 + $0x30] sm:$0xf]
  %v668 = vld [vmem:[%s4 + $0x34] sm:$0xf]
  %v669 = vld [vmem:[%s4 + $0x38] sm:$0xf]
  %v670 = vld [vmem:[%s4 + $0x3c] sm:$0xf]
  %v671 = vld [vmem:[%s4 + $0x40] sm:$0xf]
  %v672 = vld [vmem:[%s4 + $0x44] sm:$0xf]
  %v673 = vld [vmem:[%s4 + $0x48] sm:$0xf]
  %v674 = vld [vmem:[%s4 + $0x4c] sm:$0xf]
  %v675 = vld [vmem:[%s4 + $0x50] sm:$0xf]
  %v676 = vld [vmem:[%s4 + $0x54] sm:$0xf]
  %v677 = vld [vmem:[%s4 + $0x58] sm:$0xf]
  %v678 = vld [vmem:[%s4 + $0x5c] sm:$0xf]
  %v679 = vld [vmem:[%s4 + $0x60] sm:$0xf]
  %v680 = vld [vmem:[%s4 + $0x64] sm:$0xf]
  %v681 = vld [vmem:[%s4 + $0x68] sm:$0xf]
  %v682 = vld [vmem:[%s4 + $0x6c] sm:$0xf]
  %v683 = vld [vmem:[%s4 + $0x70] sm:$0xf]
  %v684 = vld [vmem:[%s4 + $0x74] sm:$0xf]
  %v685 = vld [vmem:[%s4 + $0x78] sm:$0xf]
  %v686 = vld [vmem:[%s4 + $0x7c] sm:$0xf]
  %v687 = vpack.c.bf16 %v516, %v513
  %v688 = vpack.c.bf16 %v652, %v649
  %v689 = vld [vmem:[%s2 + $0x6] sm:$0x1]
  %v690 = vlaneseq
  %v691 = vshrl.u32 %v690, 7
  %v692 = vsub.s32 0, %v691
  %v693 = vrot.slane %v689, %v692
  %v726 = vunpack.c.l.b16 %v655
  %v727 = vunpack.c.l.b16 %v656
  %v728 = vunpack.c.l.b16 %v657
  %v729 = vunpack.c.l.b16 %v658
  %v730 = vunpack.c.l.b16 %v659
  %v731 = vunpack.c.l.b16 %v660
  %v732 = vunpack.c.l.b16 %v661
  %v733 = vunpack.c.l.b16 %v662
  %v734 = vunpack.c.l.b16 %v663
  %v735 = vunpack.c.l.b16 %v664
  %v736 = vunpack.c.l.b16 %v665
  %v737 = vunpack.c.l.b16 %v666
  %v738 = vunpack.c.l.b16 %v667
  %v739 = vunpack.c.l.b16 %v668
  %v740 = vunpack.c.l.b16 %v669
  %v741 = vunpack.c.l.b16 %v670
  %v742 = vunpack.c.l.b16 %v671
  %v743 = vunpack.c.l.b16 %v672
  %v744 = vunpack.c.l.b16 %v673
  %v745 = vunpack.c.l.b16 %v674
  %v746 = vunpack.c.l.b16 %v675
  %v747 = vunpack.c.l.b16 %v676
  %v748 = vunpack.c.l.b16 %v677
  %v749 = vunpack.c.l.b16 %v678
  %v750 = vunpack.c.l.b16 %v679
  %v751 = vunpack.c.l.b16 %v680
  %v752 = vunpack.c.l.b16 %v681
  %v753 = vunpack.c.l.b16 %v682
  %v754 = vunpack.c.l.b16 %v683
  %v755 = vunpack.c.l.b16 %v684
  %v756 = vunpack.c.l.b16 %v685
  %v757 = vunpack.c.l.b16 %v686
  %v758 = vpack.c.b16 %v727, %v726
  %v759 = vpack.c.b16 %v729, %v728
  %v760 = vpack.c.b16 %v731, %v730
  %v761 = vpack.c.b16 %v733, %v732
  %v762 = vpack.c.b16 %v735, %v734
  %v763 = vpack.c.b16 %v737, %v736
  %v764 = vpack.c.b16 %v739, %v738
  %v765 = vpack.c.b16 %v741, %v740
  %v766 = vpack.c.b16 %v743, %v742
  %v767 = vpack.c.b16 %v745, %v744
  %v768 = vpack.c.b16 %v747, %v746
  %v769 = vpack.c.b16 %v749, %v748
  %v770 = vpack.c.b16 %v751, %v750
  %v771 = vpack.c.b16 %v753, %v752
  %v772 = vpack.c.b16 %v755, %v754
  %v773 = vpack.c.b16 %v757, %v756
  %790 = vmatprep.subr.bf16.mxu0 0
  %791 = vmatpush1.bf16.msra.mxu0 %v758
  %792 = vmatprep.subr.bf16.mxu0 0
  %793 = vmatpush1.bf16.msra.mxu0 %v759
  %794 = vmatprep.subr.bf16.mxu0 0
  %795 = vmatpush1.bf16.msra.mxu0 %v760
  %796 = vmatprep.subr.bf16.mxu0 0
  %797 = vmatpush1.bf16.msra.mxu0 %v761
  %798 = vmatprep.subr.bf16.mxu0 0
  %799 = vmatpush1.bf16.msra.mxu0 %v762
  %800 = vmatprep.subr.bf16.mxu0 0
  %801 = vmatpush1.bf16.msra.mxu0 %v763
  %802 = vmatprep.subr.bf16.mxu0 0
  %803 = vmatpush1.bf16.msra.mxu0 %v764
  %804 = vmatprep.subr.bf16.mxu0 0
  %805 = vmatpush1.bf16.msra.mxu0 %v765
  %806 = vmatprep.subr.bf16.mxu0 0
  %807 = vmatpush1.bf16.msra.mxu0 %v766
  %808 = vmatprep.subr.bf16.mxu0 0
  %809 = vmatpush1.bf16.msra.mxu0 %v767
  %810 = vmatprep.subr.bf16.mxu0 0
  %811 = vmatpush1.bf16.msra.mxu0 %v768
  %812 = vmatprep.subr.bf16.mxu0 0
  %813 = vmatpush1.bf16.msra.mxu0 %v769
  %814 = vmatprep.subr.bf16.mxu0 0
  %815 = vmatpush1.bf16.msra.mxu0 %v770
  %816 = vmatprep.subr.bf16.mxu0 0
  %817 = vmatpush1.bf16.msra.mxu0 %v771
  %818 = vmatprep.subr.bf16.mxu0 0
  %819 = vmatpush1.bf16.msra.mxu0 %v772
  %820 = vmatprep.subr.bf16.mxu0 0
  %821 = vmatpush1.bf16.msra.mxu0 %v773
  %822 = vmatprep.mubr.bf16.mxu0 %v688
  %823 = vmatmul.mubr.bf16.gmra.mrb[0].mxu0 %v687
  %v824 = vpop.f32.mrb[0].mxu0
  %v825 = vadd.f32 %v693, %v824
  %v826 = vpop.f32.mrb[0].mxu0
  %v827 = vpop.f32.mrb[0].mxu0
  %v828 = vadd.f32 %v693, %v827
  %v829 = vpop.f32.mrb[0].mxu0
  %830 = vdwg.mxu0
  %v831 = vadd.f32 %v175, %v825
  %v832 = vadd.f32 %v176, %v828
  %v833 = vld [vmem:[%s2 + $0x7] sm:$0x1]
  %v834 = vld [vmem:[%s2 + $0x8] sm:$0x1]
  %v835 = vsel %vm137, %v831, 0.0
  %836 = vadd.xlane.f32.xlu0 %v835
  %v837 = vpop.xlane.xlu0 %836
  %v838 = vsel %vm137, %v832, 0.0
  %839 = vadd.xlane.f32.xlu0 %v838
  %v840 = vpop.xlane.xlu0 %839
  %v841 = vmul.f32 %v837, %v144
  %v842 = vmul.f32 %v840, %v144
  %v843 = vsub.f32 %v831, %v841
  %v844 = vsub.f32 %v832, %v842
  %v845 = vmul.f32 %v843, %v843
  %v846 = vmul.f32 %v844, %v844
  %v847 = vsel %vm137, %v845, 0.0
  %848 = vadd.xlane.f32.xlu0 %v847
  %v849 = vpop.xlane.xlu0 %848
  %v850 = vsel %vm137, %v846, 0.0
  %851 = vadd.xlane.f32.xlu0 %v850
  %v852 = vpop.xlane.xlu0 %851
  %v853 = vmul.f32 %v849, %v144
  %v854 = vmul.f32 %v852, %v144
  %v855 = vadd.f32 %v853, 1e-12
  %v856 = vadd.f32 %v854, 1e-12
  %v857 = vrsqrt.pop %v855
  %v858 = vrsqrt.pop %v856
  %v859 = vmul.f32 %v843, %v857
  %v860 = vmul.f32 %v844, %v858
  %v861 = vlaneseq
  %v862 = vshrl.u32 %v861, 7
  %v863 = vsub.s32 0, %v862
  %v864 = vrot.slane %v833, %v863
  %v865 = vmul.f32 %v859, %v864
  %v866 = vmul.f32 %v860, %v864
  %v867 = vlaneseq
  %v868 = vshrl.u32 %v867, 7
  %v869 = vsub.s32 0, %v868
  %v870 = vrot.slane %v834, %v869
  %v871 = vadd.f32 %v865, %v870
  %v872 = vadd.f32 %v866, %v870
  %v873 = vld [vmem:[%s4 + $0x80] sm:$0xf]
  %v874 = vld [vmem:[%s4 + $0x84] sm:$0xf]
  %v875 = vld [vmem:[%s4 + $0x88] sm:$0xf]
  %v876 = vld [vmem:[%s4 + $0x8c] sm:$0xf]
  %v877 = vld [vmem:[%s4 + $0x90] sm:$0xf]
  %v878 = vld [vmem:[%s4 + $0x94] sm:$0xf]
  %v879 = vld [vmem:[%s4 + $0x98] sm:$0xf]
  %v880 = vld [vmem:[%s4 + $0x9c] sm:$0xf]
  %v881 = vld [vmem:[%s4 + $0xa0] sm:$0xf]
  %v882 = vld [vmem:[%s4 + $0xa4] sm:$0xf]
  %v883 = vld [vmem:[%s4 + $0xa8] sm:$0xf]
  %v884 = vld [vmem:[%s4 + $0xac] sm:$0xf]
  %v885 = vpack.c.bf16 %v872, %v871
  %v886 = vld [vmem:[%s2 + $0x9] sm:$0x1]
  %v887 = vlaneseq
  %v888 = vshrl.u32 %v887, 7
  %v889 = vsub.s32 0, %v888
  %v890 = vrot.slane %v886, %v889
  %v895 = vunpack.c.l.b16 %v873
  %v896 = vunpack.c.l.b16 %v874
  %v897 = vunpack.c.l.b16 %v875
  %v898 = vunpack.c.l.b16 %v876
  %v899 = vpack.c.b16 %v896, %v895
  %v900 = vpack.c.b16 %v898, %v897
  %v904 = vsel %vm137, %v885, 0
  %906 = vmatprep.subr.bf16.mxu0 0
  %907 = vmatpush1.bf16.msra.mxu0 %v899
  %908 = vmatprep.subr.bf16.mxu0 0
  %909 = vmatpush1.bf16.msra.mxu0 %v900
  %910 = vmatprep.subr.bf16.mxu0 0
  %911 = vmatpush1.bf16.msra.mxu0 0
  %912 = vmatprep.subr.bf16.mxu0 0
  %913 = vmatpush1.bf16.msra.mxu0 0
  %914 = vmatprep.subr.bf16.mxu0 0
  %915 = vmatpush1.bf16.msra.mxu0 0
  %916 = vmatprep.subr.bf16.mxu0 0
  %917 = vmatpush1.bf16.msra.mxu0 0
  %918 = vmatprep.subr.bf16.mxu0 0
  %919 = vmatpush1.bf16.msra.mxu0 0
  %920 = vmatprep.subr.bf16.mxu0 0
  %921 = vmatpush1.bf16.msra.mxu0 0
  %922 = vmatprep.subr.bf16.mxu0 0
  %923 = vmatpush1.bf16.msra.mxu0 0
  %924 = vmatprep.subr.bf16.mxu0 0
  %925 = vmatpush1.bf16.msra.mxu0 0
  %926 = vmatprep.subr.bf16.mxu0 0
  %927 = vmatpush1.bf16.msra.mxu0 0
  %928 = vmatprep.subr.bf16.mxu0 0
  %929 = vmatpush1.bf16.msra.mxu0 0
  %930 = vmatprep.subr.bf16.mxu0 0
  %931 = vmatpush1.bf16.msra.mxu0 0
  %932 = vmatprep.subr.bf16.mxu0 0
  %933 = vmatpush1.bf16.msra.mxu0 0
  %934 = vmatprep.subr.bf16.mxu0 0
  %935 = vmatpush1.bf16.msra.mxu0 0
  %936 = vmatprep.subr.bf16.mxu0 0
  %937 = vmatpush1.bf16.msra.mxu0 0
  %938 = vmatprep.mubr.bf16.mxu0 0
  %939 = vmatmul.mubr.bf16.gmra.mrb[0].mxu0 %v904
  %v940 = vpop.f32.mrb[0].mxu0
  %v941 = vadd.f32 %v890, %v940
  %v942 = vpop.f32.mrb[0].mxu0
  %v943 = vpop.f32.mrb[0].mxu0
  %v944 = vadd.f32 %v890, %v943
  %v945 = vpop.f32.mrb[0].mxu0
  %946 = vdwg.mxu0
  %v947 = vmul.f32 %v941, %v941
  %v948 = vmul.f32 %v944, %v944
  %v949 = vmul.f32 %v941, %v947
  %v950 = vmul.f32 %v944, %v948
  %v951 = vmul.f32 %v949, 0.044715
  %v952 = vmul.f32 %v950, 0.044715
  %v953 = vadd.f32 %v941, %v951
  %v954 = vadd.f32 %v944, %v952
  %v955 = vmul.f32 %v953, 0.7978846
  %v956 = vmul.f32 %v954, 0.7978846
  %v957 = vtanh.pop %v955
  %v958 = vtanh.pop %v956
  %v959 = vadd.f32 %v957, 1.0
  %v960 = vadd.f32 %v958, 1.0
  %v961 = vmul.f32 %v959, 0.5
  %v962 = vmul.f32 %v960, 0.5
  %v963 = vmul.f32 %v941, %v961
  %v964 = vmul.f32 %v944, %v962
  %v965 = vpack.c.bf16 %v964, %v963
  %v966 = vld [vmem:[%s2 + $0xa] sm:$0x1]
  %v967 = vlaneseq
  %v968 = vshrl.u32 %v967, 7
  %v969 = vsub.s32 0, %v968
  %v970 = vrot.slane %v966, %v969
  %v979 = vunpack.c.l.b16 %v877
  %v980 = vunpack.c.l.b16 %v878
  %v981 = vunpack.c.l.b16 %v879
  %v982 = vunpack.c.l.b16 %v880
  %v983 = vunpack.c.l.b16 %v881
  %v984 = vunpack.c.l.b16 %v882
  %v985 = vunpack.c.l.b16 %v883
  %v986 = vunpack.c.l.b16 %v884
  %v987 = vpack.c.b16 %v980, %v979
  %v988 = vpack.c.b16 %v982, %v981
  %v989 = vpack.c.b16 %v984, %v983
  %v990 = vpack.c.b16 %v986, %v985
  %v996 = vsel %vm55, %v965, 0
  %998 = vmatprep.subr.bf16.mxu0 0
  %999 = vmatpush1.bf16.msra.mxu0 %v987
  %1000 = vmatprep.subr.bf16.mxu0 0
  %1001 = vmatpush1.bf16.msra.mxu0 %v988
  %1002 = vmatprep.subr.bf16.mxu0 0
  %1003 = vmatpush1.bf16.msra.mxu0 %v989
  %1004 = vmatprep.subr.bf16.mxu0 0
  %1005 = vmatpush1.bf16.msra.mxu0 %v990
  %1006 = vmatprep.subr.bf16.mxu0 0
  %1007 = vmatpush1.bf16.msra.mxu0 0
  %1008 = vmatprep.subr.bf16.mxu0 0
  %1009 = vmatpush1.bf16.msra.mxu0 0
  %1010 = vmatprep.subr.bf16.mxu0 0
  %1011 = vmatpush1.bf16.msra.mxu0 0
  %1012 = vmatprep.subr.bf16.mxu0 0
  %1013 = vmatpush1.bf16.msra.mxu0 0
  %1014 = vmatprep.subr.bf16.mxu0 0
  %1015 = vmatpush1.bf16.msra.mxu0 0
  %1016 = vmatprep.subr.bf16.mxu0 0
  %1017 = vmatpush1.bf16.msra.mxu0 0
  %1018 = vmatprep.subr.bf16.mxu0 0
  %1019 = vmatpush1.bf16.msra.mxu0 0
  %1020 = vmatprep.subr.bf16.mxu0 0
  %1021 = vmatpush1.bf16.msra.mxu0 0
  %1022 = vmatprep.subr.bf16.mxu0 0
  %1023 = vmatpush1.bf16.msra.mxu0 0
  %1024 = vmatprep.subr.bf16.mxu0 0
  %1025 = vmatpush1.bf16.msra.mxu0 0
  %1026 = vmatprep.subr.bf16.mxu0 0
  %1027 = vmatpush1.bf16.msra.mxu0 0
  %1028 = vmatprep.subr.bf16.mxu0 0
  %1029 = vmatpush1.bf16.msra.mxu0 0
  %1030 = vmatprep.mubr.bf16.mxu0 0
  %1031 = vmatmul.mubr.bf16.gmra.mrb[0].mxu0 %v996
  %v1032 = vpop.f32.mrb[0].mxu0
  %v1033 = vadd.f32 %v970, %v1032
  %v1034 = vpop.f32.mrb[0].mxu0
  %v1035 = vpop.f32.mrb[0].mxu0
  %v1036 = vadd.f32 %v970, %v1035
  %v1037 = vpop.f32.mrb[0].mxu0
  %1038 = vdwg.mxu0
  %v1039 = vadd.f32 %v871, %v1033
  %v1040 = vadd.f32 %v872, %v1036
  %v1041 = vld [vmem:[%s2 + $0xb] sm:$0x1]
  %v1042 = vld [vmem:[%s2 + $0xc] sm:$0x1]
  %v1043 = vsel %vm137, %v1039, 0.0
  %1044 = vadd.xlane.f32.xlu0 %v1043
  %v1045 = vpop.xlane.xlu0 %1044
  %v1046 = vsel %vm137, %v1040, 0.0
  %1047 = vadd.xlane.f32.xlu0 %v1046
  %v1048 = vpop.xlane.xlu0 %1047
  %v1049 = vmul.f32 %v1045, %v144
  %v1050 = vmul.f32 %v1048, %v144
  %v1051 = vsub.f32 %v1039, %v1049
  %v1052 = vsub.f32 %v1040, %v1050
  %v1053 = vmul.f32 %v1051, %v1051
  %v1054 = vmul.f32 %v1052, %v1052
  %v1055 = vsel %vm137, %v1053, 0.0
  %1056 = vadd.xlane.f32.xlu0 %v1055
  %v1057 = vpop.xlane.xlu0 %1056
  %v1058 = vsel %vm137, %v1054, 0.0
  %1059 = vadd.xlane.f32.xlu0 %v1058
  %v1060 = vpop.xlane.xlu0 %1059
  %v1061 = vmul.f32 %v1057, %v144
  %v1062 = vmul.f32 %v1060, %v144
  %v1063 = vadd.f32 %v1061, 1e-12
  %v1064 = vadd.f32 %v1062, 1e-12
  %v1065 = vrsqrt.pop %v1063
  %v1066 = vrsqrt.pop %v1064
  %v1067 = vmul.f32 %v1051, %v1065
  %v1068 = vmul.f32 %v1052, %v1066
  %v1069 = vlaneseq
  %v1070 = vshrl.u32 %v1069, 7
  %v1071 = vsub.s32 0, %v1070
  %v1072 = vrot.slane %v1041, %v1071
  %v1073 = vmul.f32 %v1067, %v1072
  %v1074 = vmul.f32 %v1068, %v1072
  %v1075 = vlaneseq
  %v1076 = vshrl.u32 %v1075, 7
  %v1077 = vsub.s32 0, %v1076
  %v1078 = vrot.slane %v1042, %v1077
  %v1079 = vadd.f32 %v1073, %v1078
  %v1080 = vadd.f32 %v1074, %v1078
  %v1081 = vpack.c.bf16 %v1080, %v1079
  %s1082 = scalar_lea.vmem %s3, 96
  %v1083 = vld [vmem:[%s1082] sm:$0xff]
  %v1084 = vld [vmem:[%s1082 + $0x8] sm:$0xff]
  %v1085 = vld [vmem:[%s1082 + $0x10] sm:$0xff]
  %v1086 = vld [vmem:[%s1082 + $0x18] sm:$0xff]
  %v1087 = vld [vmem:[%s1082 + $0x20] sm:$0xff]
  %v1088 = vld [vmem:[%s1082 + $0x28] sm:$0xff]
  %v1089 = vld [vmem:[%s1082 + $0x30] sm:$0xff]
  %v1090 = vld [vmem:[%s1082 + $0x38] sm:$0xff]
  %v1091 = vld [vmem:[%s1082 + $0x40] sm:$0xff]
  %v1092 = vld [vmem:[%s1082 + $0x48] sm:$0xff]
  %v1093 = vld [vmem:[%s1082 + $0x50] sm:$0xff]
  %v1094 = vld [vmem:[%s1082 + $0x58] sm:$0xff]
  %v1107 = vunpack.c.l.b16 %v1083
  %v1108 = vunpack.c.h.b16 %v1083
  %v1109 = vunpack.c.l.b16 %v1084
  %v1110 = vunpack.c.h.b16 %v1084
  %v1111 = vunpack.c.l.b16 %v1085
  %v1112 = vunpack.c.h.b16 %v1085
  %v1113 = vunpack.c.l.b16 %v1086
  %v1114 = vunpack.c.h.b16 %v1086
  %v1115 = vunpack.c.l.b16 %v1087
  %v1116 = vunpack.c.h.b16 %v1087
  %v1117 = vunpack.c.l.b16 %v1088
  %v1118 = vunpack.c.h.b16 %v1088
  %v1119 = vunpack.c.l.b16 %v1089
  %v1120 = vunpack.c.h.b16 %v1089
  %v1121 = vunpack.c.l.b16 %v1090
  %v1122 = vunpack.c.h.b16 %v1090
  %v1123 = vunpack.c.l.b16 %v1091
  %v1124 = vunpack.c.h.b16 %v1091
  %v1125 = vunpack.c.l.b16 %v1092
  %v1126 = vunpack.c.h.b16 %v1092
  %v1127 = vunpack.c.l.b16 %v1093
  %v1128 = vunpack.c.h.b16 %v1093
  %v1129 = vunpack.c.l.b16 %v1094
  %v1130 = vunpack.c.h.b16 %v1094
  %v1131 = vpack.c.b16 %v1113, %v1107
  %v1132 = vpack.c.b16 %v1114, %v1108
  %v1133 = vpack.c.b16 %v1115, %v1109
  %v1134 = vpack.c.b16 %v1116, %v1110
  %v1135 = vpack.c.b16 %v1117, %v1111
  %v1136 = vpack.c.b16 %v1118, %v1112
  %v1137 = vpack.c.b16 %v1125, %v1119
  %v1138 = vpack.c.b16 %v1126, %v1120
  %v1139 = vpack.c.b16 %v1127, %v1121
  %v1140 = vpack.c.b16 %v1128, %v1122
  %v1141 = vpack.c.b16 %v1129, %v1123
  %v1142 = vpack.c.b16 %v1130, %v1124
  %v1156 = vsel %vm137, %v1081, 0
  %1158 = vmatprep.subr.bf16.mxu0 %v1132
  %1159 = vmatpush1.bf16.msra.mxu0 %v1131
  %1160 = vmatprep.subr.bf16.mxu0 %v1138
  %1161 = vmatpush1.bf16.msra.mxu0 %v1137
  %1162 = vmatprep.subr.bf16.mxu0 0
  %1163 = vmatpush1.bf16.msra.mxu0 0
  %1164 = vmatprep.subr.bf16.mxu0 0
  %1165 = vmatpush1.bf16.msra.mxu0 0
  %1166 = vmatprep.subr.bf16.mxu0 0
  %1167 = vmatpush1.bf16.msra.mxu0 0
  %1168 = vmatprep.subr.bf16.mxu0 0
  %1169 = vmatpush1.bf16.msra.mxu0 0
  %1170 = vmatprep.subr.bf16.mxu0 0
  %1171 = vmatpush1.bf16.msra.mxu0 0
  %1172 = vmatprep.subr.bf16.mxu0 0
  %1173 = vmatpush1.bf16.msra.mxu0 0
  %1174 = vmatprep.subr.bf16.mxu0 0
  %1175 = vmatpush1.bf16.msra.mxu0 0
  %1176 = vmatprep.subr.bf16.mxu0 0
  %1177 = vmatpush1.bf16.msra.mxu0 0
  %1178 = vmatprep.subr.bf16.mxu0 0
  %1179 = vmatpush1.bf16.msra.mxu0 0
  %1180 = vmatprep.subr.bf16.mxu0 0
  %1181 = vmatpush1.bf16.msra.mxu0 0
  %1182 = vmatprep.subr.bf16.mxu0 0
  %1183 = vmatpush1.bf16.msra.mxu0 0
  %1184 = vmatprep.subr.bf16.mxu0 0
  %1185 = vmatpush1.bf16.msra.mxu0 0
  %1186 = vmatprep.subr.bf16.mxu0 0
  %1187 = vmatpush1.bf16.msra.mxu0 0
  %1188 = vmatprep.subr.bf16.mxu0 0
  %1189 = vmatpush1.bf16.msra.mxu0 0
  %1190 = vmatprep.mubr.bf16.mxu0 0
  %1191 = vmatmul.mubr.bf16.gmra.mrb[0].mxu0 %v1156
  %v1192 = vpop.f32.mrb[0].mxu0
  %v1193 = vadd.f32 0.0, %v1192
  %v1194 = vpop.f32.mrb[0].mxu0
  %v1195 = vadd.f32 0.0, %v1194
  %v1196 = vpop.f32.mrb[0].mxu0
  %v1197 = vadd.f32 0.0, %v1196
  %v1198 = vpop.f32.mrb[0].mxu0
  %v1199 = vadd.f32 0.0, %v1198
  %1200 = vdwg.mxu0
  %1201 = vmatprep.subr.bf16.mxu0 %v1134
  %1202 = vmatpush1.bf16.msra.mxu0 %v1133
  %1203 = vmatprep.subr.bf16.mxu0 %v1140
  %1204 = vmatpush1.bf16.msra.mxu0 %v1139
  %1205 = vmatprep.subr.bf16.mxu0 0
  %1206 = vmatpush1.bf16.msra.mxu0 0
  %1207 = vmatprep.subr.bf16.mxu0 0
  %1208 = vmatpush1.bf16.msra.mxu0 0
  %1209 = vmatprep.subr.bf16.mxu0 0
  %1210 = vmatpush1.bf16.msra.mxu0 0
  %1211 = vmatprep.subr.bf16.mxu0 0
  %1212 = vmatpush1.bf16.msra.mxu0 0
  %1213 = vmatprep.subr.bf16.mxu0 0
  %1214 = vmatpush1.bf16.msra.mxu0 0
  %1215 = vmatprep.subr.bf16.mxu0 0
  %1216 = vmatpush1.bf16.msra.mxu0 0
  %1217 = vmatprep.subr.bf16.mxu0 0
  %1218 = vmatpush1.bf16.msra.mxu0 0
  %1219 = vmatprep.subr.bf16.mxu0 0
  %1220 = vmatpush1.bf16.msra.mxu0 0
  %1221 = vmatprep.subr.bf16.mxu0 0
  %1222 = vmatpush1.bf16.msra.mxu0 0
  %1223 = vmatprep.subr.bf16.mxu0 0
  %1224 = vmatpush1.bf16.msra.mxu0 0
  %1225 = vmatprep.subr.bf16.mxu0 0
  %1226 = vmatpush1.bf16.msra.mxu0 0
  %1227 = vmatprep.subr.bf16.mxu0 0
  %1228 = vmatpush1.bf16.msra.mxu0 0
  %1229 = vmatprep.subr.bf16.mxu0 0
  %1230 = vmatpush1.bf16.msra.mxu0 0
  %1231 = vmatprep.subr.bf16.mxu0 0
  %1232 = vmatpush1.bf16.msra.mxu0 0
  %1233 = vmatprep.mubr.bf16.mxu0 0
  %1234 = vmatmul.mubr.bf16.gmra.mrb[0].mxu0 %v1156
  %v1235 = vpop.f32.mrb[0].mxu0
  %v1236 = vadd.f32 0.0, %v1235
  %v1237 = vpop.f32.mrb[0].mxu0
  %v1238 = vadd.f32 0.0, %v1237
  %v1239 = vpop.f32.mrb[0].mxu0
  %v1240 = vadd.f32 0.0, %v1239
  %v1241 = vpop.f32.mrb[0].mxu0
  %v1242 = vadd.f32 0.0, %v1241
  %1243 = vdwg.mxu0
  %1244 = vmatprep.subr.bf16.mxu0 %v1136
  %1245 = vmatpush1.bf16.msra.mxu0 %v1135
  %1246 = vmatprep.subr.bf16.mxu0 %v1142
  %1247 = vmatpush1.bf16.msra.mxu0 %v1141
  %1248 = vmatprep.subr.bf16.mxu0 0
  %1249 = vmatpush1.bf16.msra.mxu0 0
  %1250 = vmatprep.subr.bf16.mxu0 0
  %1251 = vmatpush1.bf16.msra.mxu0 0
  %1252 = vmatprep.subr.bf16.mxu0 0
  %1253 = vmatpush1.bf16.msra.mxu0 0
  %1254 = vmatprep.subr.bf16.mxu0 0
  %1255 = vmatpush1.bf16.msra.mxu0 0
  %1256 = vmatprep.subr.bf16.mxu0 0
  %1257 = vmatpush1.bf16.msra.mxu0 0
  %1258 = vmatprep.subr.bf16.mxu0 0
  %1259 = vmatpush1.bf16.msra.mxu0 0
  %1260 = vmatprep.subr.bf16.mxu0 0
  %1261 = vmatpush1.bf16.msra.mxu0 0
  %1262 = vmatprep.subr.bf16.mxu0 0
  %1263 = vmatpush1.bf16.msra.mxu0 0
  %1264 = vmatprep.subr.bf16.mxu0 0
  %1265 = vmatpush1.bf16.msra.mxu0 0
  %1266 = vmatprep.subr.bf16.mxu0 0
  %1267 = vmatpush1.bf16.msra.mxu0 0
  %1268 = vmatprep.subr.bf16.mxu0 0
  %1269 = vmatpush1.bf16.msra.mxu0 0
  %1270 = vmatprep.subr.bf16.mxu0 0
  %1271 = vmatpush1.bf16.msra.mxu0 0
  %1272 = vmatprep.subr.bf16.mxu0 0
  %1273 = vmatpush1.bf16.msra.mxu0 0
  %1274 = vmatprep.subr.bf16.mxu0 0
  %1275 = vmatpush1.bf16.msra.mxu0 0
  %1276 = vmatprep.mubr.bf16.mxu0 0
  %1277 = vmatmul.mubr.bf16.gmra.mrb[0].mxu0 %v1156
  %v1278 = vpop.f32.mrb[0].mxu0
  %v1279 = vadd.f32 0.0, %v1278
  %v1280 = vpop.f32.mrb[0].mxu0
  %v1281 = vadd.f32 0.0, %v1280
  %v1282 = vpop.f32.mrb[0].mxu0
  %v1283 = vadd.f32 0.0, %v1282
  %v1284 = vpop.f32.mrb[0].mxu0
  %v1285 = vadd.f32 0.0, %v1284
  %1286 = vdwg.mxu0
  %v1287 = vld [vmem:[%s2 + $0x10] sm:$0x1]
  %v1288 = vlaneseq
  %v1289 = vshrl.u32 %v1288, 7
  %v1290 = vsub.s32 0, %v1289
  %v1291 = vrot.slane %v1287, %v1290
  %v1292 = vadd.f32 %v1193, %v1291
  %v1293 = vadd.f32 %v1197, %v1291
  %v1294 = vld [vmem:[%s2 + $0x12] sm:$0x1]
  %v1295 = vlaneseq
  %v1296 = vshrl.u32 %v1295, 7
  %v1297 = vsub.s32 0, %v1296
  %v1298 = vrot.slane %v1294, %v1297
  %v1299 = vadd.f32 %v1236, %v1298
  %v1300 = vadd.f32 %v1240, %v1298
  %v1301 = vld [vmem:[%s2 + $0x14] sm:$0x1]
  %v1302 = vlaneseq
  %v1303 = vshrl.u32 %v1302, 7
  %v1304 = vsub.s32 0, %v1303
  %v1305 = vrot.slane %v1301, %v1304
  %v1306 = vadd.f32 %v1279, %v1305
  %v1307 = vadd.f32 %v1283, %v1305
  %v1308 = vpack.c.bf16 %v1293, %v1292
  %v1309 = vpack.c.bf16 %v1300, %v1299
  %1310 = vmatprep.subr.bf16.mxu0 0
  %1311 = vmatpush1.bf16.xpose.msra.mxu0 %v1309
  %1312 = vmatprep.subr.bf16.mxu0 0
  %1313 = vmatpush1.bf16.xpose.msra.mxu0 0
  %1314 = vmatprep.subr.bf16.mxu0 0
  %1315 = vmatpush1.bf16.xpose.msra.mxu0 0
  %1316 = vmatprep.subr.bf16.mxu0 0
  %1317 = vmatpush1.bf16.xpose.msra.mxu0 0
  %1318 = vmatprep.subr.bf16.mxu0 0
  %1319 = vmatpush1.bf16.xpose.msra.mxu0 0
  %1320 = vmatprep.subr.bf16.mxu0 0
  %1321 = vmatpush1.bf16.xpose.msra.mxu0 0
  %1322 = vmatprep.subr.bf16.mxu0 0
  %1323 = vmatpush1.bf16.xpose.msra.mxu0 0
  %1324 = vmatprep.subr.bf16.mxu0 0
  %1325 = vmatpush1.bf16.xpose.msra.mxu0 0
  %1326 = vmatprep.subr.bf16.mxu0 0
  %1327 = vmatpush1.bf16.xpose.msra.mxu0 0
  %1328 = vmatprep.subr.bf16.mxu0 0
  %1329 = vmatpush1.bf16.xpose.msra.mxu0 0
  %1330 = vmatprep.subr.bf16.mxu0 0
  %1331 = vmatpush1.bf16.xpose.msra.mxu0 0
  %1332 = vmatprep.subr.bf16.mxu0 0
  %1333 = vmatpush1.bf16.xpose.msra.mxu0 0
  %1334 = vmatprep.subr.bf16.mxu0 0
  %1335 = vmatpush1.bf16.xpose.msra.mxu0 0
  %1336 = vmatprep.subr.bf16.mxu0 0
  %1337 = vmatpush1.bf16.xpose.msra.mxu0 0
  %1338 = vmatprep.subr.bf16.mxu0 0
  %1339 = vmatpush1.bf16.xpose.msra.mxu0 0
  %1340 = vmatprep.subr.bf16.mxu0 0
  %1341 = vmatpush1.bf16.xpose.msra.mxu0 0
  %1342 = vmatprep.mubr.bf16.mxu0 0
  %1343 = vmatmul.mubr.bf16.gmra.mrb[0].mxu0 %v1308
  %v1344 = vpop.f32.mrb[0].mxu0
  %v1345 = vadd.f32 0.0, %v1344
  %v1346 = vpop.f32.mrb[0].mxu0
  %v1347 = vpop.f32.mrb[0].mxu0
  %v1348 = vadd.f32 0.0, %v1347
  %v1349 = vpop.f32.mrb[0].mxu0
  %1350 = vdwg.mxu0
  %v1351 = vmul.f32 %v1345, 0.25
  %v1352 = vmul.f32 %v1348, 0.25
  %v1353 = vadd.f32 %v1351, %v21
  %v1354 = vadd.f32 %v1352, %v22
  %v1355 = vsel %vm450, %v1353, -inf
  %1356 = vmax.xlane.f32.xlu0 %v1355
  %v1357 = vpop.xlane.xlu0 %1356
  %v1358 = vsel %vm450, %v1354, -inf
  %1359 = vmax.xlane.f32.xlu0 %v1358
  %v1360 = vpop.xlane.xlu0 %1359
  %v1361 = vsub.f32 %v1353, %v1357
  %v1362 = vsub.f32 %v1354, %v1360
  %v1363 = vmul.f32 %v1361, 1.442695
  %v1364 = vpow.pop %v1363
  %v1365 = vmul.f32 %v1362, 1.442695
  %v1366 = vpow.pop %v1365
  %v1367 = vsel %vm450, %v1364, 0.0
  %1368 = vadd.xlane.f32.xlu0 %v1367
  %v1369 = vpop.xlane.xlu0 %1368
  %v1370 = vsel %vm450, %v1366, 0.0
  %1371 = vadd.xlane.f32.xlu0 %v1370
  %v1372 = vpop.xlane.xlu0 %1371
  %v1373 = vrcp.pop %v1369
  %v1374 = vmul.f32 %v1364, %v1373
  %v1375 = vrcp.pop %v1372
  %v1376 = vmul.f32 %v1366, %v1375
  %v1377 = vpack.c.bf16 %v1376, %v1374
  %v1378 = vpack.c.bf16 %v1307, %v1306
  %v1380 = vsel %vm450, %v1377, 0
  %1382 = vmatprep.subr.bf16.mxu0 0
  %1383 = vmatpush1.bf16.msra.mxu0 %v1378
  %1384 = vmatprep.subr.bf16.mxu0 0
  %1385 = vmatpush1.bf16.msra.mxu0 0
  %1386 = vmatprep.subr.bf16.mxu0 0
  %1387 = vmatpush1.bf16.msra.mxu0 0
  %1388 = vmatprep.subr.bf16.mxu0 0
  %1389 = vmatpush1.bf16.msra.mxu0 0
  %1390 = vmatprep.subr.bf16.mxu0 0
  %1391 = vmatpush1.bf16.msra.mxu0 0
  %1392 = vmatprep.subr.bf16.mxu0 0
  %1393 = vmatpush1.bf16.msra.mxu0 0
  %1394 = vmatprep.subr.bf16.mxu0 0
  %1395 = vmatpush1.bf16.msra.mxu0 0
  %1396 = vmatprep.subr.bf16.mxu0 0
  %1397 = vmatpush1.bf16.msra.mxu0 0
  %1398 = vmatprep.subr.bf16.mxu0 0
  %1399 = vmatpush1.bf16.msra.mxu0 0
  %1400 = vmatprep.subr.bf16.mxu0 0
  %1401 = vmatpush1.bf16.msra.mxu0 0
  %1402 = vmatprep.subr.bf16.mxu0 0
  %1403 = vmatpush1.bf16.msra.mxu0 0
  %1404 = vmatprep.subr.bf16.mxu0 0
  %1405 = vmatpush1.bf16.msra.mxu0 0
  %1406 = vmatprep.subr.bf16.mxu0 0
  %1407 = vmatpush1.bf16.msra.mxu0 0
  %1408 = vmatprep.subr.bf16.mxu0 0
  %1409 = vmatpush1.bf16.msra.mxu0 0
  %1410 = vmatprep.subr.bf16.mxu0 0
  %1411 = vmatpush1.bf16.msra.mxu0 0
  %1412 = vmatprep.subr.bf16.mxu0 0
  %1413 = vmatpush1.bf16.msra.mxu0 0
  %1414 = vmatprep.mubr.bf16.mxu0 0
  %1415 = vmatmul.mubr.bf16.gmra.mrb[0].mxu0 %v1380
  %v1416 = vpop.f32.mrb[0].mxu0
  %v1417 = vadd.f32 0.0, %v1416
  %v1418 = vpop.f32.mrb[0].mxu0
  %v1419 = vpop.f32.mrb[0].mxu0
  %v1420 = vadd.f32 0.0, %v1419
  %v1421 = vpop.f32.mrb[0].mxu0
  %1422 = vdwg.mxu0
  %v1423 = vld [vmem:[%s2 + $0x11] sm:$0x1]
  %v1424 = vlaneseq
  %v1425 = vshrl.u32 %v1424, 7
  %v1426 = vsub.s32 0, %v1425
  %v1427 = vrot.slane %v1423, %v1426
  %v1428 = vadd.f32 %v1195, %v1427
  %v1429 = vadd.f32 %v1199, %v1427
  %v1430 = vld [vmem:[%s2 + $0x13] sm:$0x1]
  %v1431 = vlaneseq
  %v1432 = vshrl.u32 %v1431, 7
  %v1433 = vsub.s32 0, %v1432
  %v1434 = vrot.slane %v1430, %v1433
  %v1435 = vadd.f32 %v1238, %v1434
  %v1436 = vadd.f32 %v1242, %v1434
  %v1437 = vld [vmem:[%s2 + $0x15] sm:$0x1]
  %v1438 = vlaneseq
  %v1439 = vshrl.u32 %v1438, 7
  %v1440 = vsub.s32 0, %v1439
  %v1441 = vrot.slane %v1437, %v1440
  %v1442 = vadd.f32 %v1281, %v1441
  %v1443 = vadd.f32 %v1285, %v1441
  %v1444 = vpack.c.bf16 %v1429, %v1428
  %v1445 = vpack.c.bf16 %v1436, %v1435
  %1446 = vmatprep.subr.bf16.mxu0 0
  %1447 = vmatpush1.bf16.xpose.msra.mxu0 %v1445
  %1448 = vmatprep.subr.bf16.mxu0 0
  %1449 = vmatpush1.bf16.xpose.msra.mxu0 0
  %1450 = vmatprep.subr.bf16.mxu0 0
  %1451 = vmatpush1.bf16.xpose.msra.mxu0 0
  %1452 = vmatprep.subr.bf16.mxu0 0
  %1453 = vmatpush1.bf16.xpose.msra.mxu0 0
  %1454 = vmatprep.subr.bf16.mxu0 0
  %1455 = vmatpush1.bf16.xpose.msra.mxu0 0
  %1456 = vmatprep.subr.bf16.mxu0 0
  %1457 = vmatpush1.bf16.xpose.msra.mxu0 0
  %1458 = vmatprep.subr.bf16.mxu0 0
  %1459 = vmatpush1.bf16.xpose.msra.mxu0 0
  %1460 = vmatprep.subr.bf16.mxu0 0
  %1461 = vmatpush1.bf16.xpose.msra.mxu0 0
  %1462 = vmatprep.subr.bf16.mxu0 0
  %1463 = vmatpush1.bf16.xpose.msra.mxu0 0
  %1464 = vmatprep.subr.bf16.mxu0 0
  %1465 = vmatpush1.bf16.xpose.msra.mxu0 0
  %1466 = vmatprep.subr.bf16.mxu0 0
  %1467 = vmatpush1.bf16.xpose.msra.mxu0 0
  %1468 = vmatprep.subr.bf16.mxu0 0
  %1469 = vmatpush1.bf16.xpose.msra.mxu0 0
  %1470 = vmatprep.subr.bf16.mxu0 0
  %1471 = vmatpush1.bf16.xpose.msra.mxu0 0
  %1472 = vmatprep.subr.bf16.mxu0 0
  %1473 = vmatpush1.bf16.xpose.msra.mxu0 0
  %1474 = vmatprep.subr.bf16.mxu0 0
  %1475 = vmatpush1.bf16.xpose.msra.mxu0 0
  %1476 = vmatprep.subr.bf16.mxu0 0
  %1477 = vmatpush1.bf16.xpose.msra.mxu0 0
  %1478 = vmatprep.mubr.bf16.mxu0 0
  %1479 = vmatmul.mubr.bf16.gmra.mrb[0].mxu0 %v1444
  %v1480 = vpop.f32.mrb[0].mxu0
  %v1481 = vadd.f32 0.0, %v1480
  %v1482 = vpop.f32.mrb[0].mxu0
  %v1483 = vpop.f32.mrb[0].mxu0
  %v1484 = vadd.f32 0.0, %v1483
  %v1485 = vpop.f32.mrb[0].mxu0
  %1486 = vdwg.mxu0
  %v1487 = vmul.f32 %v1481, 0.25
  %v1488 = vmul.f32 %v1484, 0.25
  %v1489 = vadd.f32 %v1487, %v21
  %v1490 = vadd.f32 %v1488, %v22
  %v1491 = vsel %vm450, %v1489, -inf
  %1492 = vmax.xlane.f32.xlu0 %v1491
  %v1493 = vpop.xlane.xlu0 %1492
  %v1494 = vsel %vm450, %v1490, -inf
  %1495 = vmax.xlane.f32.xlu0 %v1494
  %v1496 = vpop.xlane.xlu0 %1495
  %v1497 = vsub.f32 %v1489, %v1493
  %v1498 = vsub.f32 %v1490, %v1496
  %v1499 = vmul.f32 %v1497, 1.442695
  %v1500 = vpow.pop %v1499
  %v1501 = vmul.f32 %v1498, 1.442695
  %v1502 = vpow.pop %v1501
  %v1503 = vsel %vm450, %v1500, 0.0
  %1504 = vadd.xlane.f32.xlu0 %v1503
  %v1505 = vpop.xlane.xlu0 %1504
  %v1506 = vsel %vm450, %v1502, 0.0
  %1507 = vadd.xlane.f32.xlu0 %v1506
  %v1508 = vpop.xlane.xlu0 %1507
  %v1509 = vrcp.pop %v1505
  %v1510 = vmul.f32 %v1500, %v1509
  %v1511 = vrcp.pop %v1508
  %v1512 = vmul.f32 %v1502, %v1511
  %v1513 = vpack.c.bf16 %v1512, %v1510
  %v1514 = vpack.c.bf16 %v1443, %v1442
  %v1516 = vsel %vm450, %v1513, 0
  %1518 = vmatprep.subr.bf16.mxu0 0
  %1519 = vmatpush1.bf16.msra.mxu0 %v1514
  %1520 = vmatprep.subr.bf16.mxu0 0
  %1521 = vmatpush1.bf16.msra.mxu0 0
  %1522 = vmatprep.subr.bf16.mxu0 0
  %1523 = vmatpush1.bf16.msra.mxu0 0
  %1524 = vmatprep.subr.bf16.mxu0 0
  %1525 = vmatpush1.bf16.msra.mxu0 0
  %1526 = vmatprep.subr.bf16.mxu0 0
  %1527 = vmatpush1.bf16.msra.mxu0 0
  %1528 = vmatprep.subr.bf16.mxu0 0
  %1529 = vmatpush1.bf16.msra.mxu0 0
  %1530 = vmatprep.subr.bf16.mxu0 0
  %1531 = vmatpush1.bf16.msra.mxu0 0
  %1532 = vmatprep.subr.bf16.mxu0 0
  %1533 = vmatpush1.bf16.msra.mxu0 0
  %1534 = vmatprep.subr.bf16.mxu0 0
  %1535 = vmatpush1.bf16.msra.mxu0 0
  %1536 = vmatprep.subr.bf16.mxu0 0
  %1537 = vmatpush1.bf16.msra.mxu0 0
  %1538 = vmatprep.subr.bf16.mxu0 0
  %1539 = vmatpush1.bf16.msra.mxu0 0
  %1540 = vmatprep.subr.bf16.mxu0 0
  %1541 = vmatpush1.bf16.msra.mxu0 0
  %1542 = vmatprep.subr.bf16.mxu0 0
  %1543 = vmatpush1.bf16.msra.mxu0 0
  %1544 = vmatprep.subr.bf16.mxu0 0
  %1545 = vmatpush1.bf16.msra.mxu0 0
  %1546 = vmatprep.subr.bf16.mxu0 0
  %1547 = vmatpush1.bf16.msra.mxu0 0
  %1548 = vmatprep.subr.bf16.mxu0 0
  %1549 = vmatpush1.bf16.msra.mxu0 0
  %1550 = vmatprep.mubr.bf16.mxu0 0
  %1551 = vmatmul.mubr.bf16.gmra.mrb[0].mxu0 %v1516
  %v1552 = vpop.f32.mrb[0].mxu0
  %v1553 = vadd.f32 0.0, %v1552
  %v1554 = vpop.f32.mrb[0].mxu0
  %v1555 = vpop.f32.mrb[0].mxu0
  %v1556 = vadd.f32 0.0, %v1555
  %v1557 = vpop.f32.mrb[0].mxu0
  %1558 = vdwg.mxu0
  %v1559 = vld [vmem:[%s4 + $0xb0] sm:$0xf]
  %v1560 = vld [vmem:[%s4 + $0xb4] sm:$0xf]
  %v1561 = vld [vmem:[%s4 + $0xb8] sm:$0xf]
  %v1562 = vld [vmem:[%s4 + $0xbc] sm:$0xf]
  %v1563 = vld [vmem:[%s4 + $0xc0] sm:$0xf]
  %v1564 = vld [vmem:[%s4 + $0xc4] sm:$0xf]
  %v1565 = vld [vmem:[%s4 + $0xc8] sm:$0xf]
  %v1566 = vld [vmem:[%s4 + $0xcc] sm:$0xf]
  %v1567 = vld [vmem:[%s4 + $0xd0] sm:$0xf]
  %v1568 = vld [vmem:[%s4 + $0xd4] sm:$0xf]
  %v1569 = vld [vmem:[%s4 + $0xd8] sm:$0xf]
  %v1570 = vld [vmem:[%s4 + $0xdc] sm:$0xf]
  %v1571 = vld [vmem:[%s4 + $0xe0] sm:$0xf]
  %v1572 = vld [vmem:[%s4 + $0xe4] sm:$0xf]
  %v1573 = vld [vmem:[%s4 + $0xe8] sm:$0xf]
  %v1574 = vld [vmem:[%s4 + $0xec] sm:$0xf]
  %v1575 = vld [vmem:[%s4 + $0xf0] sm:$0xf]
  %v1576 = vld [vmem:[%s4 + $0xf4] sm:$0xf]
  %v1577 = vld [vmem:[%s4 + $0xf8] sm:$0xf]
  %v1578 = vld [vmem:[%s4 + $0xfc] sm:$0xf]
  %v1579 = vld [vmem:[%s4 + $0x100] sm:$0xf]
  %v1580 = vld [vmem:[%s4 + $0x104] sm:$0xf]
  %v1581 = vld [vmem:[%s4 + $0x108] sm:$0xf]
  %v1582 = vld [vmem:[%s4 + $0x10c] sm:$0xf]
  %v1583 = vld [vmem:[%s4 + $0x110] sm:$0xf]
  %v1584 = vld [vmem:[%s4 + $0x114] sm:$0xf]
  %v1585 = vld [vmem:[%s4 + $0x118] sm:$0xf]
  %v1586 = vld [vmem:[%s4 + $0x11c] sm:$0xf]
  %v1587 = vld [vmem:[%s4 + $0x120] sm:$0xf]
  %v1588 = vld [vmem:[%s4 + $0x124] sm:$0xf]
  %v1589 = vld [vmem:[%s4 + $0x128] sm:$0xf]
  %v1590 = vld [vmem:[%s4 + $0x12c] sm:$0xf]
  %v1591 = vpack.c.bf16 %v1420, %v1417
  %v1592 = vpack.c.bf16 %v1556, %v1553
  %v1593 = vld [vmem:[%s2 + $0x16] sm:$0x1]
  %v1594 = vlaneseq
  %v1595 = vshrl.u32 %v1594, 7
  %v1596 = vsub.s32 0, %v1595
  %v1597 = vrot.slane %v1593, %v1596
  %v1630 = vunpack.c.l.b16 %v1559
  %v1631 = vunpack.c.l.b16 %v1560
  %v1632 = vunpack.c.l.b16 %v1561
  %v1633 = vunpack.c.l.b16 %v1562
  %v1634 = vunpack.c.l.b16 %v1563
  %v1635 = vunpack.c.l.b16 %v1564
  %v1636 = vunpack.c.l.b16 %v1565
  %v1637 = vunpack.c.l.b16 %v1566
  %v1638 = vunpack.c.l.b16 %v1567
  %v1639 = vunpack.c.l.b16 %v1568
  %v1640 = vunpack.c.l.b16 %v1569
  %v1641 = vunpack.c.l.b16 %v1570
  %v1642 = vunpack.c.l.b16 %v1571
  %v1643 = vunpack.c.l.b16 %v1572
  %v1644 = vunpack.c.l.b16 %v1573
  %v1645 = vunpack.c.l.b16 %v1574
  %v1646 = vunpack.c.l.b16 %v1575
  %v1647 = vunpack.c.l.b16 %v1576
  %v1648 = vunpack.c.l.b16 %v1577
  %v1649 = vunpack.c.l.b16 %v1578
  %v1650 = vunpack.c.l.b16 %v1579
  %v1651 = vunpack.c.l.b16 %v1580
  %v1652 = vunpack.c.l.b16 %v1581
  %v1653 = vunpack.c.l.b16 %v1582
  %v1654 = vunpack.c.l.b16 %v1583
  %v1655 = vunpack.c.l.b16 %v1584
  %v1656 = vunpack.c.l.b16 %v1585
  %v1657 = vunpack.c.l.b16 %v1586
  %v1658 = vunpack.c.l.b16 %v1587
  %v1659 = vunpack.c.l.b16 %v1588
  %v1660 = vunpack.c.l.b16 %v1589
  %v1661 = vunpack.c.l.b16 %v1590
  %v1662 = vpack.c.b16 %v1631, %v1630
  %v1663 = vpack.c.b16 %v1633, %v1632
  %v1664 = vpack.c.b16 %v1635, %v1634
  %v1665 = vpack.c.b16 %v1637, %v1636
  %v1666 = vpack.c.b16 %v1639, %v1638
  %v1667 = vpack.c.b16 %v1641, %v1640
  %v1668 = vpack.c.b16 %v1643, %v1642
  %v1669 = vpack.c.b16 %v1645, %v1644
  %v1670 = vpack.c.b16 %v1647, %v1646
  %v1671 = vpack.c.b16 %v1649, %v1648
  %v1672 = vpack.c.b16 %v1651, %v1650
  %v1673 = vpack.c.b16 %v1653, %v1652
  %v1674 = vpack.c.b16 %v1655, %v1654
  %v1675 = vpack.c.b16 %v1657, %v1656
  %v1676 = vpack.c.b16 %v1659, %v1658
  %v1677 = vpack.c.b16 %v1661, %v1660
  %1694 = vmatprep.subr.bf16.mxu0 0
  %1695 = vmatpush1.bf16.msra.mxu0 %v1662
  %1696 = vmatprep.subr.bf16.mxu0 0
  %1697 = vmatpush1.bf16.msra.mxu0 %v1663
  %1698 = vmatprep.subr.bf16.mxu0 0
  %1699 = vmatpush1.bf16.msra.mxu0 %v1664
  %1700 = vmatprep.subr.bf16.mxu0 0
  %1701 = vmatpush1.bf16.msra.mxu0 %v1665
  %1702 = vmatprep.subr.bf16.mxu0 0
  %1703 = vmatpush1.bf16.msra.mxu0 %v1666
  %1704 = vmatprep.subr.bf16.mxu0 0
  %1705 = vmatpush1.bf16.msra.mxu0 %v1667
  %1706 = vmatprep.subr.bf16.mxu0 0
  %1707 = vmatpush1.bf16.msra.mxu0 %v1668
  %1708 = vmatprep.subr.bf16.mxu0 0
  %1709 = vmatpush1.bf16.msra.mxu0 %v1669
  %1710 = vmatprep.subr.bf16.mxu0 0
  %1711 = vmatpush1.bf16.msra.mxu0 %v1670
  %1712 = vmatprep.subr.bf16.mxu0 0
  %1713 = vmatpush1.bf16.msra.mxu0 %v1671
  %1714 = vmatprep.subr.bf16.mxu0 0
  %1715 = vmatpush1.bf16.msra.mxu0 %v1672
  %1716 = vmatprep.subr.bf16.mxu0 0
  %1717 = vmatpush1.bf16.msra.mxu0 %v1673
  %1718 = vmatprep.subr.bf16.mxu0 0
  %1719 = vmatpush1.bf16.msra.mxu0 %v1674
  %1720 = vmatprep.subr.bf16.mxu0 0
  %1721 = vmatpush1.bf16.msra.mxu0 %v1675
  %1722 = vmatprep.subr.bf16.mxu0 0
  %1723 = vmatpush1.bf16.msra.mxu0 %v1676
  %1724 = vmatprep.subr.bf16.mxu0 0
  %1725 = vmatpush1.bf16.msra.mxu0 %v1677
  %1726 = vmatprep.mubr.bf16.mxu0 %v1592
  %1727 = vmatmul.mubr.bf16.gmra.mrb[0].mxu0 %v1591
  %v1728 = vpop.f32.mrb[0].mxu0
  %v1729 = vadd.f32 %v1597, %v1728
  %v1730 = vpop.f32.mrb[0].mxu0
  %v1731 = vpop.f32.mrb[0].mxu0
  %v1732 = vadd.f32 %v1597, %v1731
  %v1733 = vpop.f32.mrb[0].mxu0
  %1734 = vdwg.mxu0
  %v1735 = vadd.f32 %v1079, %v1729
  %v1736 = vadd.f32 %v1080, %v1732
  %v1737 = vld [vmem:[%s2 + $0x17] sm:$0x1]
  %v1738 = vld [vmem:[%s2 + $0x18] sm:$0x1]
  %v1739 = vsel %vm137, %v1735, 0.0
  %1740 = vadd.xlane.f32.xlu0 %v1739
  %v1741 = vpop.xlane.xlu0 %1740
  %v1742 = vsel %vm137, %v1736, 0.0
  %1743 = vadd.xlane.f32.xlu0 %v1742
  %v1744 = vpop.xlane.xlu0 %1743
  %v1745 = vmul.f32 %v1741, %v144
  %v1746 = vmul.f32 %v1744, %v144
  %v1747 = vsub.f32 %v1735, %v1745
  %v1748 = vsub.f32 %v1736, %v1746
  %v1749 = vmul.f32 %v1747, %v1747
  %v1750 = vmul.f32 %v1748, %v1748
  %v1751 = vsel %vm137, %v1749, 0.0
  %1752 = vadd.xlane.f32.xlu0 %v1751
  %v1753 = vpop.xlane.xlu0 %1752
  %v1754 = vsel %vm137, %v1750, 0.0
  %1755 = vadd.xlane.f32.xlu0 %v1754
  %v1756 = vpop.xlane.xlu0 %1755
  %v1757 = vmul.f32 %v1753, %v144
  %v1758 = vmul.f32 %v1756, %v144
  %v1759 = vadd.f32 %v1757, 1e-12
  %v1760 = vadd.f32 %v1758, 1e-12
  %v1761 = vrsqrt.pop %v1759
  %v1762 = vrsqrt.pop %v1760
  %v1763 = vmul.f32 %v1747, %v1761
  %v1764 = vmul.f32 %v1748, %v1762
  %v1765 = vlaneseq
  %v1766 = vshrl.u32 %v1765, 7
  %v1767 = vsub.s32 0, %v1766
  %v1768 = vrot.slane %v1737, %v1767
  %v1769 = vmul.f32 %v1763, %v1768
  %v1770 = vmul.f32 %v1764, %v1768
  %v1771 = vlaneseq
  %v1772 = vshrl.u32 %v1771, 7
  %v1773 = vsub.s32 0, %v1772
  %v1774 = vrot.slane %v1738, %v1773
  %v1775 = vadd.f32 %v1769, %v1774
  %v1776 = vadd.f32 %v1770, %v1774
  %v1777 = vld [vmem:[%s4 + $0x130] sm:$0xf]
  %v1778 = vld [vmem:[%s4 + $0x134] sm:$0xf]
  %v1779 = vld [vmem:[%s4 + $0x138] sm:$0xf]
  %v1780 = vld [vmem:[%s4 + $0x13c] sm:$0xf]
  %v1781 = vld [vmem:[%s4 + $0x140] sm:$0xf]
  %v1782 = vld [vmem:[%s4 + $0x144] sm:$0xf]
  %v1783 = vld [vmem:[%s4 + $0x148] sm:$0xf]
  %v1784 = vld [vmem:[%s4 + $0x14c] sm:$0xf]
  %v1785 = vld [vmem:[%s4 + $0x150] sm:$0xf]
  %v1786 = vld [vmem:[%s4 + $0x154] sm:$0xf]
  %v1787 = vld [vmem:[%s4 + $0x158] sm:$0xf]
  %v1788 = vld [vmem:[%s4 + $0x15c] sm:$0xf]
  %v1789 = vpack.c.bf16 %v1776, %v1775
  %v1790 = vld [vmem:[%s2 + $0x19] sm:$0x1]
  %v1791 = vlaneseq
  %v1792 = vshrl.u32 %v1791, 7
  %v1793 = vsub.s32 0, %v1792
  %v1794 = vrot.slane %v1790, %v1793
  %v1799 = vunpack.c.l.b16 %v1777
  %v1800 = vunpack.c.l.b16 %v1778
  %v1801 = vunpack.c.l.b16 %v1779
  %v1802 = vunpack.c.l.b16 %v1780
  %v1803 = vpack.c.b16 %v1800, %v1799
  %v1804 = vpack.c.b16 %v1802, %v1801
  %v1808 = vsel %vm137, %v1789, 0
  %1810 = vmatprep.subr.bf16.mxu0 0
  %1811 = vmatpush1.bf16.msra.mxu0 %v1803
  %1812 = vmatprep.subr.bf16.mxu0 0
  %1813 = vmatpush1.bf16.msra.mxu0 %v1804
  %1814 = vmatprep.subr.bf16.mxu0 0
  %1815 = vmatpush1.bf16.msra.mxu0 0
  %1816 = vmatprep.subr.bf16.mxu0 0
  %1817 = vmatpush1.bf16.msra.mxu0 0
  %1818 = vmatprep.subr.bf16.mxu0 0
  %1819 = vmatpush1.bf16.msra.mxu0 0
  %1820 = vmatprep.subr.bf16.mxu0 0
  %1821 = vmatpush1.bf16.msra.mxu0 0
  %1822 = vmatprep.subr.bf16.mxu0 0
  %1823 = vmatpush1.bf16.msra.mxu0 0
  %1824 = vmatprep.subr.bf16.mxu0 0
  %1825 = vmatpush1.bf16.msra.mxu0 0
  %1826 = vmatprep.subr.bf16.mxu0 0
  %1827 = vmatpush1.bf16.msra.mxu0 0
  %1828 = vmatprep.subr.bf16.mxu0 0
  %1829 = vmatpush1.bf16.msra.mxu0 0
  %1830 = vmatprep.subr.bf16.mxu0 0
  %1831 = vmatpush1.bf16.msra.mxu0 0
  %1832 = vmatprep.subr.bf16.mxu0 0
  %1833 = vmatpush1.bf16.msra.mxu0 0
  %1834 = vmatprep.subr.bf16.mxu0 0
  %1835 = vmatpush1.bf16.msra.mxu0 0
  %1836 = vmatprep.subr.bf16.mxu0 0
  %1837 = vmatpush1.bf16.msra.mxu0 0
  %1838 = vmatprep.subr.bf16.mxu0 0
  %1839 = vmatpush1.bf16.msra.mxu0 0
  %1840 = vmatprep.subr.bf16.mxu0 0
  %1841 = vmatpush1.bf16.msra.mxu0 0
  %1842 = vmatprep.mubr.bf16.mxu0 0
  %1843 = vmatmul.mubr.bf16.gmra.mrb[0].mxu0 %v1808
  %v1844 = vpop.f32.mrb[0].mxu0
  %v1845 = vadd.f32 %v1794, %v1844
  %v1846 = vpop.f32.mrb[0].mxu0
  %v1847 = vpop.f32.mrb[0].mxu0
  %v1848 = vadd.f32 %v1794, %v1847
  %v1849 = vpop.f32.mrb[0].mxu0
  %1850 = vdwg.mxu0
  %v1851 = vmul.f32 %v1845, %v1845
  %v1852 = vmul.f32 %v1848, %v1848
  %v1853 = vmul.f32 %v1845, %v1851
  %v1854 = vmul.f32 %v1848, %v1852
  %v1855 = vmul.f32 %v1853, 0.044715
  %v1856 = vmul.f32 %v1854, 0.044715
  %v1857 = vadd.f32 %v1845, %v1855
  %v1858 = vadd.f32 %v1848, %v1856
  %v1859 = vmul.f32 %v1857, 0.7978846
  %v1860 = vmul.f32 %v1858, 0.7978846
  %v1861 = vtanh.pop %v1859
  %v1862 = vtanh.pop %v1860
  %v1863 = vadd.f32 %v1861, 1.0
  %v1864 = vadd.f32 %v1862, 1.0
  %v1865 = vmul.f32 %v1863, 0.5
  %v1866 = vmul.f32 %v1864, 0.5
  %v1867 = vmul.f32 %v1845, %v1865
  %v1868 = vmul.f32 %v1848, %v1866
  %v1869 = vpack.c.bf16 %v1868, %v1867
  %v1870 = vld [vmem:[%s2 + $0x1a] sm:$0x1]
  %v1871 = vlaneseq
  %v1872 = vshrl.u32 %v1871, 7
  %v1873 = vsub.s32 0, %v1872
  %v1874 = vrot.slane %v1870, %v1873
  %v1883 = vunpack.c.l.b16 %v1781
  %v1884 = vunpack.c.l.b16 %v1782
  %v1885 = vunpack.c.l.b16 %v1783
  %v1886 = vunpack.c.l.b16 %v1784
  %v1887 = vunpack.c.l.b16 %v1785
  %v1888 = vunpack.c.l.b16 %v1786
  %v1889 = vunpack.c.l.b16 %v1787
  %v1890 = vunpack.c.l.b16 %v1788
  %v1891 = vpack.c.b16 %v1884, %v1883
  %v1892 = vpack.c.b16 %v1886, %v1885
  %v1893 = vpack.c.b16 %v1888, %v1887
  %v1894 = vpack.c.b16 %v1890, %v1889
  %v1900 = vsel %vm55, %v1869, 0
  %1902 = vmatprep.subr.bf16.mxu0 0
  %1903 = vmatpush1.bf16.msra.mxu0 %v1891
  %1904 = vmatprep.subr.bf16.mxu0 0
  %1905 = vmatpush1.bf16.msra.mxu0 %v1892
  %1906 = vmatprep.subr.bf16.mxu0 0
  %1907 = vmatpush1.bf16.msra.mxu0 %v1893
  %1908 = vmatprep.subr.bf16.mxu0 0
  %1909 = vmatpush1.bf16.msra.mxu0 %v1894
  %1910 = vmatprep.subr.bf16.mxu0 0
  %1911 = vmatpush1.bf16.msra.mxu0 0
  %1912 = vmatprep.subr.bf16.mxu0 0
  %1913 = vmatpush1.bf16.msra.mxu0 0
  %1914 = vmatprep.subr.bf16.mxu0 0
  %1915 = vmatpush1.bf16.msra.mxu0 0
  %1916 = vmatprep.subr.bf16.mxu0 0
  %1917 = vmatpush1.bf16.msra.mxu0 0
  %1918 = vmatprep.subr.bf16.mxu0 0
  %1919 = vmatpush1.bf16.msra.mxu0 0
  %1920 = vmatprep.subr.bf16.mxu0 0
  %1921 = vmatpush1.bf16.msra.mxu0 0
  %1922 = vmatprep.subr.bf16.mxu0 0
  %1923 = vmatpush1.bf16.msra.mxu0 0
  %1924 = vmatprep.subr.bf16.mxu0 0
  %1925 = vmatpush1.bf16.msra.mxu0 0
  %1926 = vmatprep.subr.bf16.mxu0 0
  %1927 = vmatpush1.bf16.msra.mxu0 0
  %1928 = vmatprep.subr.bf16.mxu0 0
  %1929 = vmatpush1.bf16.msra.mxu0 0
  %1930 = vmatprep.subr.bf16.mxu0 0
  %1931 = vmatpush1.bf16.msra.mxu0 0
  %1932 = vmatprep.subr.bf16.mxu0 0
  %1933 = vmatpush1.bf16.msra.mxu0 0
  %1934 = vmatprep.mubr.bf16.mxu0 0
  %1935 = vmatmul.mubr.bf16.gmra.mrb[0].mxu0 %v1900
  %v1936 = vpop.f32.mrb[0].mxu0
  %v1937 = vadd.f32 %v1874, %v1936
  %v1938 = vpop.f32.mrb[0].mxu0
  %v1939 = vpop.f32.mrb[0].mxu0
  %v1940 = vadd.f32 %v1874, %v1939
  %v1941 = vpop.f32.mrb[0].mxu0
  %1942 = vdwg.mxu0
  %v1943 = vadd.f32 %v1775, %v1937
  %v1944 = vadd.f32 %v1776, %v1940
  %v1945 = vld [vmem:[%s2 + $0x1b] sm:$0x1]
  %v1946 = vld [vmem:[%s2 + $0x1c] sm:$0x1]
  %v1947 = vsel %vm137, %v1943, 0.0
  %1948 = vadd.xlane.f32.xlu0 %v1947
  %v1949 = vpop.xlane.xlu0 %1948
  %v1950 = vsel %vm137, %v1944, 0.0
  %1951 = vadd.xlane.f32.xlu0 %v1950
  %v1952 = vpop.xlane.xlu0 %1951
  %v1953 = vmul.f32 %v1949, %v144
  %v1954 = vmul.f32 %v1952, %v144
  %v1955 = vsub.f32 %v1943, %v1953
  %v1956 = vsub.f32 %v1944, %v1954
  %v1957 = vmul.f32 %v1955, %v1955
  %v1958 = vmul.f32 %v1956, %v1956
  %v1959 = vsel %vm137, %v1957, 0.0
  %1960 = vadd.xlane.f32.xlu0 %v1959
  %v1961 = vpop.xlane.xlu0 %1960
  %v1962 = vsel %vm137, %v1958, 0.0
  %1963 = vadd.xlane.f32.xlu0 %v1962
  %v1964 = vpop.xlane.xlu0 %1963
  %v1965 = vmul.f32 %v1961, %v144
  %v1966 = vmul.f32 %v1964, %v144
  %v1967 = vadd.f32 %v1965, 1e-12
  %v1968 = vadd.f32 %v1966, 1e-12
  %v1969 = vrsqrt.pop %v1967
  %v1970 = vrsqrt.pop %v1968
  %v1971 = vmul.f32 %v1955, %v1969
  %v1972 = vmul.f32 %v1956, %v1970
  %v1973 = vlaneseq
  %v1974 = vshrl.u32 %v1973, 7
  %v1975 = vsub.s32 0, %v1974
  %v1976 = vrot.slane %v1945, %v1975
  %v1977 = vmul.f32 %v1971, %v1976
  %v1978 = vmul.f32 %v1972, %v1976
  %v1979 = vlaneseq
  %v1980 = vshrl.u32 %v1979, 7
  %v1981 = vsub.s32 0, %v1980
  %v1982 = vrot.slane %v1946, %v1981
  %v1983 = vadd.f32 %v1977, %v1982
  %v1984 = vadd.f32 %v1978, %v1982
  %v1986 = vsel %vm450, %v23, 0
  %v1989 = vsel %vm450, %v24, 0
  %1991 = vmatprep.subr.mxu0 0.0
  %1992 = vmatpush1.msra.mxu0 %v1983
  %1993 = vmatprep.subr.mxu0 0.0
  %1994 = vmatpush1.msra.mxu0 %v1984
  %1995 = vmatprep.subr.mxu0 0.0
  %1996 = vmatpush1.msra.mxu0 0.0
  %1997 = vmatprep.subr.mxu0 0.0
  %1998 = vmatpush1.msra.mxu0 0.0
  %1999 = vmatprep.subr.mxu0 0.0
  %2000 = vmatpush1.msra.mxu0 0.0
  %2001 = vmatprep.subr.mxu0 0.0
  %2002 = vmatpush1.msra.mxu0 0.0
  %2003 = vmatprep.subr.mxu0 0.0
  %2004 = vmatpush1.msra.mxu0 0.0
  %2005 = vmatprep.subr.mxu0 0.0
  %2006 = vmatpush1.msra.mxu0 0.0
  %2007 = vmatprep.subr.mxu0 0.0
  %2008 = vmatpush1.msra.mxu0 0.0
  %2009 = vmatprep.subr.mxu0 0.0
  %2010 = vmatpush1.msra.mxu0 0.0
  %2011 = vmatprep.subr.mxu0 0.0
  %2012 = vmatpush1.msra.mxu0 0.0
  %2013 = vmatprep.subr.mxu0 0.0
  %2014 = vmatpush1.msra.mxu0 0.0
  %2015 = vmatprep.subr.mxu0 0.0
  %2016 = vmatpush1.msra.mxu0 0.0
  %2017 = vmatprep.subr.mxu0 0.0
  %2018 = vmatpush1.msra.mxu0 0.0
  %2019 = vmatprep.subr.mxu0 0.0
  %2020 = vmatpush1.msra.mxu0 0.0
  %2021 = vmatprep.subr.mxu0 0.0
  %2022 = vmatpush1.msra.mxu0 0.0
  %2023 = vmatprep.subr.mxu0 0.0
  %2024 = vmatpush1.msra.mxu0 0.0
  %2025 = vmatprep.subr.mxu0 0.0
  %2026 = vmatpush1.msra.mxu0 0.0
  %2027 = vmatprep.subr.mxu0 0.0
  %2028 = vmatpush1.msra.mxu0 0.0
  %2029 = vmatprep.subr.mxu0 0.0
  %2030 = vmatpush1.msra.mxu0 0.0
  %2031 = vmatprep.subr.mxu0 0.0
  %2032 = vmatpush1.msra.mxu0 0.0
  %2033 = vmatprep.subr.mxu0 0.0
  %2034 = vmatpush1.msra.mxu0 0.0
  %2035 = vmatprep.subr.mxu0 0.0
  %2036 = vmatpush1.msra.mxu0 0.0
  %2037 = vmatprep.subr.mxu0 0.0
  %2038 = vmatpush1.msra.mxu0 0.0
  %2039 = vmatprep.subr.mxu0 0.0
  %2040 = vmatpush1.msra.mxu0 0.0
  %2041 = vmatprep.subr.mxu0 0.0
  %2042 = vmatpush1.msra.mxu0 0.0
  %2043 = vmatprep.subr.mxu0 0.0
  %2044 = vmatpush1.msra.mxu0 0.0
  %2045 = vmatprep.subr.mxu0 0.0
  %2046 = vmatpush1.msra.mxu0 0.0
  %2047 = vmatprep.subr.mxu0 0.0
  %2048 = vmatpush1.msra.mxu0 0.0
  %2049 = vmatprep.subr.mxu0 0.0
  %2050 = vmatpush1.msra.mxu0 0.0
  %2051 = vmatprep.subr.mxu0 0.0
  %2052 = vmatpush1.msra.mxu0 0.0
  %2053 = vmatprep.subr.mxu0 0.0
  %2054 = vmatpush1.msra.mxu0 0.0
  %2055 = vmatprep.mubr.f32.mxu0 0.0
  %2056 = vmatmul.mubr.f32.gmra.mrb[0].mxu0 %v1986
  %v2057 = vpop.f32.mrb[0].mxu0
  %v2058 = vadd.f32 0.0, %v2057
  %v2059 = vpop.f32.mrb[0].mxu0
  %2060 = vmatprep.mubr.f32.mxu0 0.0
  %2061 = vmatmul.mubr.f32.gmra.mrb[0].mxu0 %v1989
  %v2062 = vpop.f32.mrb[0].mxu0
  %v2063 = vadd.f32 0.0, %v2062
  %v2064 = vpop.f32.mrb[0].mxu0
  %2065 = vdwg.mxu0
  %v2066 = vld [vmem:[%s4 + $0x160] sm:$0xf]
  %v2067 = vld [vmem:[%s4 + $0x164] sm:$0xf]
  %v2068 = vld [vmem:[%s4 + $0x168] sm:$0xf]
  %v2069 = vld [vmem:[%s4 + $0x16c] sm:$0xf]
  %v2070 = vld [vmem:[%s4 + $0x170] sm:$0xf]
  %v2071 = vld [vmem:[%s4 + $0x174] sm:$0xf]
  %v2072 = vld [vmem:[%s4 + $0x178] sm:$0xf]
  %v2073 = vld [vmem:[%s4 + $0x17c] sm:$0xf]
  %v2074 = vld [vmem:[%s4 + $0x180] sm:$0xf]
  %v2075 = vld [vmem:[%s4 + $0x184] sm:$0xf]
  %v2076 = vld [vmem:[%s4 + $0x188] sm:$0xf]
  %v2077 = vld [vmem:[%s4 + $0x18c] sm:$0xf]
  %v2078 = vpack.c.bf16 %v2058, %v2058
  %v2079 = vlaneseq
  %v2080 = vshrl.u32 %v2079, 7
  %v2081 = vsub.s32 0, %v2080
  %v2082 = vrot.slane %v27, %v2081
  %v2087 = vunpack.c.l.b16 %v2066
  %v2088 = vunpack.c.l.b16 %v2067
  %v2089 = vunpack.c.l.b16 %v2068
  %v2090 = vunpack.c.l.b16 %v2069
  %v2091 = vpack.c.b16 %v2088, %v2087
  %v2092 = vpack.c.b16 %v2090, %v2089
  %v2096 = vsel %vm137, %v2078, 0
  %2098 = vmatprep.subr.bf16.mxu0 0
  %2099 = vmatpush1.bf16.msra.mxu0 %v2091
  %2100 = vmatprep.subr.bf16.mxu0 0
  %2101 = vmatpush1.bf16.msra.mxu0 %v2092
  %2102 = vmatprep.subr.bf16.mxu0 0
  %2103 = vmatpush1.bf16.msra.mxu0 0
  %2104 = vmatprep.subr.bf16.mxu0 0
  %2105 = vmatpush1.bf16.msra.mxu0 0
  %2106 = vmatprep.subr.bf16.mxu0 0
  %2107 = vmatpush1.bf16.msra.mxu0 0
  %2108 = vmatprep.subr.bf16.mxu0 0
  %2109 = vmatpush1.bf16.msra.mxu0 0
  %2110 = vmatprep.subr.bf16.mxu0 0
  %2111 = vmatpush1.bf16.msra.mxu0 0
  %2112 = vmatprep.subr.bf16.mxu0 0
  %2113 = vmatpush1.bf16.msra.mxu0 0
  %2114 = vmatprep.subr.bf16.mxu0 0
  %2115 = vmatpush1.bf16.msra.mxu0 0
  %2116 = vmatprep.subr.bf16.mxu0 0
  %2117 = vmatpush1.bf16.msra.mxu0 0
  %2118 = vmatprep.subr.bf16.mxu0 0
  %2119 = vmatpush1.bf16.msra.mxu0 0
  %2120 = vmatprep.subr.bf16.mxu0 0
  %2121 = vmatpush1.bf16.msra.mxu0 0
  %2122 = vmatprep.subr.bf16.mxu0 0
  %2123 = vmatpush1.bf16.msra.mxu0 0
  %2124 = vmatprep.subr.bf16.mxu0 0
  %2125 = vmatpush1.bf16.msra.mxu0 0
  %2126 = vmatprep.subr.bf16.mxu0 0
  %2127 = vmatpush1.bf16.msra.mxu0 0
  %2128 = vmatprep.subr.bf16.mxu0 0
  %2129 = vmatpush1.bf16.msra.mxu0 0
  %2130 = vmatprep.mubr.bf16.mxu0 0
  %2131 = vmatmul.mubr.bf16.gmra.mrb[0].mxu0 %v2096
  %v2132 = vpop.f32.mrb[0].mxu0
  %v2133 = vadd.f32 %v2082, %v2132
  %v2134 = vpop.f32.mrb[0].mxu0
  %v2135 = vpop.f32.mrb[0].mxu0
  %v2136 = vpop.f32.mrb[0].mxu0
  %2137 = vdwg.mxu0
  %v2138 = vtanh.pop %v2133
  %2140 = vrot.lane.b32.xlu0 %v2063, 32
  %v2141 = vpop.permute.xlu0 %2140
  %v2143 = vsel %vm137, %v2138, %v2141
  %v2144 = vpack.c.bf16 %v2143, %v2143
  %v2145 = vlaneseq
  %v2146 = vshrl.u32 %v2145, 7
  %v2147 = vsub.s32 0, %v2146
  %v2148 = vrot.slane %v28, %v2147
  %v2157 = vunpack.c.l.b16 %v2070
  %v2158 = vunpack.c.l.b16 %v2071
  %v2159 = vunpack.c.l.b16 %v2072
  %v2160 = vunpack.c.l.b16 %v2073
  %v2161 = vunpack.c.l.b16 %v2074
  %v2162 = vunpack.c.l.b16 %v2075
  %v2163 = vunpack.c.l.b16 %v2076
  %v2164 = vunpack.c.l.b16 %v2077
  %v2165 = vpack.c.b16 %v2158, %v2157
  %v2166 = vpack.c.b16 %v2160, %v2159
  %v2167 = vpack.c.b16 %v2162, %v2161
  %v2168 = vpack.c.b16 %v2164, %v2163
  %v2174 = vsel %vm55, %v2144, 0
  %2176 = vmatprep.subr.bf16.mxu0 0
  %2177 = vmatpush1.bf16.msra.mxu0 %v2165
  %2178 = vmatprep.subr.bf16.mxu0 0
  %2179 = vmatpush1.bf16.msra.mxu0 %v2166
  %2180 = vmatprep.subr.bf16.mxu0 0
  %2181 = vmatpush1.bf16.msra.mxu0 %v2167
  %2182 = vmatprep.subr.bf16.mxu0 0
  %2183 = vmatpush1.bf16.msra.mxu0 %v2168
  %2184 = vmatprep.subr.bf16.mxu0 0
  %2185 = vmatpush1.bf16.msra.mxu0 0
  %2186 = vmatprep.subr.bf16.mxu0 0
  %2187 = vmatpush1.bf16.msra.mxu0 0
  %2188 = vmatprep.subr.bf16.mxu0 0
  %2189 = vmatpush1.bf16.msra.mxu0 0
  %2190 = vmatprep.subr.bf16.mxu0 0
  %2191 = vmatpush1.bf16.msra.mxu0 0
  %2192 = vmatprep.subr.bf16.mxu0 0
  %2193 = vmatpush1.bf16.msra.mxu0 0
  %2194 = vmatprep.subr.bf16.mxu0 0
  %2195 = vmatpush1.bf16.msra.mxu0 0
  %2196 = vmatprep.subr.bf16.mxu0 0
  %2197 = vmatpush1.bf16.msra.mxu0 0
  %2198 = vmatprep.subr.bf16.mxu0 0
  %2199 = vmatpush1.bf16.msra.mxu0 0
  %2200 = vmatprep.subr.bf16.mxu0 0
  %2201 = vmatpush1.bf16.msra.mxu0 0
  %2202 = vmatprep.subr.bf16.mxu0 0
  %2203 = vmatpush1.bf16.msra.mxu0 0
  %2204 = vmatprep.subr.bf16.mxu0 0
  %2205 = vmatpush1.bf16.msra.mxu0 0
  %2206 = vmatprep.subr.bf16.mxu0 0
  %2207 = vmatpush1.bf16.msra.mxu0 0
  %2208 = vmatprep.mubr.bf16.mxu0 0
  %2209 = vmatmul.mubr.bf16.gmra.mrb[0].mxu0 %v2174
  %v2210 = vpop.f32.mrb[0].mxu0
  %v2211 = vadd.f32 %v2148, %v2210
  %v2212 = vpop.f32.mrb[0].mxu0
  %v2213 = vpop.f32.mrb[0].mxu0
  %v2214 = vpop.f32.mrb[0].mxu0
  %2215 = vdwg.mxu0
  %2217 = vrot.lane.b32.xlu0 %v2211, 64
  %v2218 = vpop.permute.xlu0 %2217
  %v2220 = vsel %vm55, %v2143, %v2218
  %2221 = vst [vmem:[%s5] sm:$0xff] %v2220
  // Predicated region
  $region22: #{bert_based_classifier.1} parent=0 // pred_check
    _
  $region23: #{bert_based_classifier.1} parent=0 // pred_check_branch
    %2223 = sbr.rel (0) target = $region25
  $region24: #{bert_based_classifier.1} parent=0 // pred_region
    _
  $region25: #{bert_based_classifier.1} parent=0 // pred_fallthru
    _
  // Predicated region
  $region26: #{bert_based_classifier.1} parent=0 // pred_check
    _
  $region27: #{bert_based_classifier.1} parent=0 // pred_check_branch
    %2225 = sbr.rel (0) target = $region29
  $region28: #{bert_based_classifier.1} parent=0 // pred_region
    _
  $region29: #{bert_based_classifier.1} parent=0 // pred_fallthru
    _

</llo_original>
